<compile_context>
chip_gen: v7x
topology: tpu7x:2x2x1
jax: 0.10.0
libtpu: 0.0.40
codegen_flags: <defaults>
</compile_context>

<pallas_src>
import functools

import jax
import jax.numpy as jnp
from jax.experimental import pallas as pl
from jax.experimental.pallas import tpu as pltpu


# -----------------------------------------------------------------------------
# Kernel: `step` GNNCell applications for one batch tile, hidden resident in VMEM.
# -----------------------------------------------------------------------------
def _gnn_fused_kernel(*refs, clip_norm, has_noise, use_bf16, vpu_adj):
    if has_noise:
        (ain_ref, aout_ref, h0_ref, u_ref, nin_ref, nout_ref,
         we_ref, be_ref, wih_ref, whh_ref, bg_ref, out_ref, hcar_ref) = refs
    else:
        (ain_ref, aout_ref, h0_ref, u_ref,
         we_ref, be_ref, wih_ref, whh_ref, bg_ref, out_ref, hcar_ref) = refs
        nin_ref = nout_ref = None

    Bt, N, D = h0_ref.shape
    U = u_ref.shape[-1]
    K = D + U
    M = Bt * N
    mm_dtype = jnp.bfloat16 if use_bf16 else jnp.float32

    s_id = pl.program_id(1)
    n_steps = pl.num_programs(1)

    # Step 0 of every batch tile: load initial hidden into the carry.
    @pl.when(s_id == 0)
    def _():
        hcar_ref[...] = h0_ref[...]

    hid = hcar_ref[...]                       # (Bt, N, D) f32
    uh = u_ref[...]                           # (Bt, 1, U) f32

    # ---- H_bar = F.normalize(cat([hid, uh]), dim=-1) * clip_norm ----
    ss = (jnp.sum(hid * hid, axis=-1, keepdims=True)
          + jnp.sum(uh * uh, axis=-1, keepdims=True))           # (Bt, N, 1)
    inv = clip_norm * jax.lax.rsqrt(jnp.maximum(ss, 1e-24))     # == clip / max(||H||, 1e-12)
    hb_h = hid * inv                          # (Bt, N, D)
    hb_u = uh * inv                           # (Bt, N, U) (broadcast over N)
    hb = jnp.concatenate([hb_h, hb_u], axis=-1)                 # (Bt, N, K)

    # ---- adjacency contraction ----
    if vpu_adj:
        # N is tiny: unrolled broadcast-multiply-accumulate on the VPU,
        # avoids Bt separate (N,N)@(N,K) MXU launches.
        a_in = ain_ref[...].astype(jnp.float32)
        a_out = aout_ref[...].astype(jnp.float32)
        p_in = jnp.zeros((Bt, N, K), jnp.float32)
        p_out = jnp.zeros((Bt, N, K), jnp.float32)
        for j in range(N):
            hb_j = hb[:, j:j + 1, :]                            # (Bt, 1, K)
            p_in = p_in + a_in[:, :, j:j + 1] * hb_j
            p_out = p_out + a_out[:, :, j:j + 1] * hb_j
    else:
        a_in = ain_ref[...].astype(mm_dtype)
        a_out = aout_ref[...].astype(mm_dtype)
        hb_mm = hb.astype(mm_dtype)
        p_in = jnp.einsum("bij,bjk->bik", a_in, hb_mm,
                          preferred_element_type=jnp.float32)
        p_out = jnp.einsum("bij,bjk->bik", a_out, hb_mm,
                           preferred_element_type=jnp.float32)

    # ---- + sigma^2 * N(0,1)  (noise pre-scaled in the wrapper, skipped if sigma==0) ----
    if has_noise:
        p_in = p_in + nin_ref[0]
        p_out = p_out + nout_ref[0]

    # ---- edge linears: (M, K) @ (K, D) with folded biases ----
    p_in2 = p_in.reshape(M, K).astype(mm_dtype)
    p_out2 = p_out.reshape(M, K).astype(mm_dtype)
    x_in = jnp.dot(p_in2, we_ref[0], preferred_element_type=jnp.float32) + be_ref[0]
    x_out = jnp.dot(p_out2, we_ref[1], preferred_element_type=jnp.float32) + be_ref[1]

    # ---- GRU-style gates: fused (M,2D)@(2D,3D) and (M,D)@(D,3D) ----
    inputs = jnp.concatenate([x_in, x_out], axis=-1).astype(mm_dtype)   # (M, 2D)
    h2 = hb_h.reshape(M, D)                                             # normalized hidden, f32
    gi = jnp.dot(inputs, wih_ref[...], preferred_element_type=jnp.float32) + bg_ref[0]
    gh = jnp.dot(h2.astype(mm_dtype), whh_ref[...], preferred_element_type=jnp.float32) + bg_ref[1]

    i_r, i_i, i_n = gi[:, :D], gi[:, D:2 * D], gi[:, 2 * D:]
    h_r, h_i, h_n = gh[:, :D], gh[:, D:2 * D], gh[:, 2 * D:]
    resetgate = jax.nn.sigmoid(i_r + h_r)
    inputgate = jax.nn.sigmoid(i_i + h_i)
    newgate = jnp.tanh(i_n + resetgate * h_n)

    e_it = h2 + inputgate * (newgate - h2)    # (M, D) f32
    e_it = e_it.reshape(Bt, N, D)

    hcar_ref[...] = e_it                      # carry to next step

    @pl.when(s_id == n_steps - 1)
    def _():
        out_ref[...] = e_it.astype(out_ref.dtype)


# -----------------------------------------------------------------------------
# Wrapper-side parameter packing / tiling.
# -----------------------------------------------------------------------------
def _pick_block_b(B, N, target_rows=1024, min_tiles=1):
    """Largest divisor of B with fused rows block_b*N <= target_rows.

    min_tiles=1 (single big tile) is right for single-TC v5e/v6e; pass
    min_tiles=2 on v7x so the 'parallel' batch axis shards across both TCs.
    """
    divisors = [d for d in range(1, B + 1) if B % d == 0]
    best = 1
    for d in divisors:
        if d * N <= max(target_rows, N):
            best = d
    if min_tiles > 1:
        for d in sorted(divisors, reverse=True):
            if B // d >= min_tiles and d * N <= max(target_rows, N):
                best = d
                break
    return best


def prepare_params(p, hidden_size, user_hidden_size, use_bf16=True):
    """Repack PyTorch-layout parameters into fused / folded kernel tensors."""
    D, U = hidden_size, user_hidden_size
    wdt = jnp.bfloat16 if use_bf16 else jnp.float32

    # Edge linears: full (D+U, D) weights per direction, biases folded with b_iah/b_oah.
    w_edge = jnp.stack([p["w_edge_in"].T, p["w_edge_out"].T]).astype(wdt)     # (2, D+U, D)
    b_edge = jnp.stack([(p["b_edge_in"] + p["b_iah"]).reshape(1, D),
                        (p["b_edge_out"] + p["b_oah"]).reshape(1, D)]).astype(jnp.float32)

    # GRU gates: single packed (2D, 3D) and (D, 3D) weights (gi/gh each one matmul).
    w_ih_t = p["w_ih"].T.astype(wdt)                                          # (2D, 3D)
    w_hh_t = p["w_hh"].T.astype(wdt)                                          # (D, 3D)
    b_gate = jnp.stack([p["b_ih"].reshape(1, 3 * D),
                        p["b_hh"].reshape(1, 3 * D)]).astype(jnp.float32)     # (2, 1, 3D)

    return dict(w_edge=w_edge, b_edge=b_edge,
                w_ih_t=w_ih_t, w_hh_t=w_hh_t, b_gate=b_gate)


def gnn_cell_fused(a_in, a_out, hidden, user_hidden, noise, kparams, *,
                   clip_norm, step, block_b, use_bf16):
    B, N, D = hidden.shape
    U = user_hidden.shape[-1]
    K = D + U
    n_bt = B // block_b
    vpu_adj = N <= 16
    has_noise = noise is not None

    kern = functools.partial(_gnn_fused_kernel, clip_norm=float(clip_norm),
                             has_noise=has_noise, use_bf16=bool(use_bf16),
                             vpu_adj=vpu_adj)

    def bmap(b, s):      # per-batch-tile tensors (constant over the step axis)
        return (b, 0, 0)

    def wmap2(b, s):     # grid-invariant 2-D weights
        return (0, 0)

    def wmap3(b, s):     # grid-invariant 3-D weights
        return (0, 0, 0)

    def nmap(b, s):      # per-(step, batch tile) noise block
        return (s, b, 0, 0)

    in_specs = [
        pl.BlockSpec((block_b, N, N), bmap),        # A_in
        pl.BlockSpec((block_b, N, N), bmap),        # A_out
        pl.BlockSpec((block_b, N, D), bmap),        # initial hidden
        pl.BlockSpec((block_b, 1, U), bmap),        # user_hidden
    ]
    args = [a_in, a_out, hidden, user_hidden]
    if has_noise:
        in_specs += [pl.BlockSpec((1, block_b, N, K), nmap),   # noise (in direction)
                     pl.BlockSpec((1, block_b, N, K), nmap)]   # noise (out direction)
        args += [noise[:, 0], noise[:, 1]]
    in_specs += [
        pl.BlockSpec((2, K, D), wmap3),             # edge weights
        pl.BlockSpec((2, 1, D), wmap3),             # folded edge biases
        pl.BlockSpec((2 * D, 3 * D), wmap2),        # packed w_ih^T
        pl.BlockSpec((D, 3 * D), wmap2),            # packed w_hh^T
        pl.BlockSpec((2, 1, 3 * D), wmap3),         # gate biases [b_ih; b_hh]
    ]
    args += [kparams["w_edge"], kparams["b_edge"],
             kparams["w_ih_t"], kparams["w_hh_t"], kparams["b_gate"]]

    return pl.pallas_call(
        kern,
        out_shape=jax.ShapeDtypeStruct((B, N, D), jnp.float32),
        grid_spec=pltpu.PrefetchScalarGridSpec(
            num_scalar_prefetch=0,
            grid=(n_bt, step),
            in_specs=in_specs,
            out_specs=pl.BlockSpec((block_b, N, D), bmap),
            scratch_shapes=[pltpu.VMEM((block_b, N, D), jnp.float32)],
        ),
        compiler_params=pltpu.CompilerParams(
            dimension_semantics=("parallel", "arbitrary")),
    )(*args)


def gnn_forward(A, hidden, users, user_emb_table, params, *, clip_norm, sigma, step,
                seed=0, use_bf16=True, block_b=None, min_tiles=1):
    """Full GNN.forward: `step` GNNCell applications, output feeds the next step."""
    assert step >= 1
    B, N, D = hidden.shape
    U = user_emb_table.shape[-1]
    if block_b is None:
        block_b = _pick_block_b(B, N, min_tiles=min_tiles)
    assert B % block_b == 0

    kparams = prepare_params(params, D, U, use_bf16=use_bf16)
    # TODO(synk): user_side_info=True path (embedding of user_fe features) not
    # implemented; this follows the users-index embedding branch of the module.
    user_hidden = user_emb_table[users].reshape(B, 1, U).astype(jnp.float32)

    # Adjacency: split + cast wrapper-side (step-invariant, stays VMEM-resident).
    vpu_adj = N <= 16
    adj_dtype = jnp.bfloat16 if (use_bf16 and not vpu_adj) else jnp.float32
    a_in = A[:, :, :N].astype(adj_dtype)
    a_out = A[:, :, N:2 * N].astype(adj_dtype)

    sigma = float(sigma)
    if sigma != 0.0:
        # Reference adds sigma**2 * randn(...); pre-scale here so the kernel only adds.
        noise = (sigma ** 2) * jax.random.normal(
            jax.random.PRNGKey(seed), (step, 2, B, N, D + U), dtype=jnp.float32)
    else:
        noise = None

    return gnn_cell_fused(a_in, a_out, hidden.astype(jnp.float32), user_hidden, noise,
                          kparams, clip_norm=clip_norm, step=step,
                          block_b=block_b, use_bf16=use_bf16)


# -----------------------------------------------------------------------------
# Pure-JAX reference (for a sigma=0 correctness check) + deterministic init.
# -----------------------------------------------------------------------------
def gnn_reference(A, hidden, users, user_emb_table, params, *, clip_norm, step):
    B, N, D = hidden.shape
    U = user_emb_table.shape[-1]
    uh = jnp.broadcast_to(user_emb_table[users].reshape(B, 1, U), (B, N, U))
    h = hidden
    for _ in range(step):
        H = jnp.concatenate([h, uh], axis=2)
        norm = jnp.maximum(jnp.linalg.norm(H, axis=2, keepdims=True), 1e-12)
        Hb = H / norm * clip_norm
        pin = jnp.einsum("bij,bjk->bik", A[:, :, :N], Hb)
        pout = jnp.einsum("bij,bjk->bik", A[:, :, N:2 * N], Hb)
        xin = pin @ params["w_edge_in"].T + params["b_edge_in"] + params["b_iah"]
        xout = pout @ params["w_edge_out"].T + params["b_edge_out"] + params["b_oah"]
        inputs = jnp.concatenate([xin, xout], axis=2)
        gi = inputs @ params["w_ih"].T + params["b_ih"]
        h2 = Hb[:, :, :D]
        gh = h2 @ params["w_hh"].T + params["b_hh"]
        i_r, i_i, i_n = jnp.split(gi, 3, axis=2)
        h_r, h_i, h_n = jnp.split(gh, 3, axis=2)
        r = jax.nn.sigmoid(i_r + h_r)
        i = jax.nn.sigmoid(i_i + h_i)
        n = jnp.tanh(i_n + r * h_n)
        h = h2 + i * (n - h2)
    return h


def init_params(key, hidden_size, user_hidden_size):
    D, U = hidden_size, user_hidden_size
    stdv = 1.0 / (D ** 0.5)
    ks = jax.random.split(key, 10)
    uni = lambda k, shape: jax.random.uniform(k, shape, jnp.float32, -stdv, stdv)
    return {
        "w_ih":       uni(ks[0], (3 * D, 2 * D)),
        "w_hh":       uni(ks[1], (3 * D, D)),
        "b_ih":       uni(ks[2], (3 * D,)),
        "b_hh":       uni(ks[3], (3 * D,)),
        "b_iah":      uni(ks[4], (D,)),
        "b_oah":      uni(ks[5], (D,)),
        "w_edge_in":  uni(ks[6], (D, D + U)),
        "b_edge_in":  uni(ks[7], (D,)),
        "w_edge_out": uni(ks[8], (D, D + U)),
        "b_edge_out": uni(ks[9], (D,)),
    }


if __name__ == "__main__":
    B, N = 2, 8                 # batch, max_n_node
    D, U = 32, 16               # hidden_size, user_hidden_size
    NUM_USERS = 10
    STEP = 2
    CLIP_NORM = 1.0
    SIGMA = 0.1

    key = jax.random.PRNGKey(0)
    k_par, k_A, k_h, k_u, k_emb = jax.random.split(key, 5)

    params = init_params(k_par, D, U)
    A = jax.random.uniform(k_A, (B, N, 2 * N), dtype=jnp.float32)
    hidden = jax.random.normal(k_h, (B, N, D), dtype=jnp.float32)
    users = jax.random.randint(k_u, (B,), 0, NUM_USERS)
    user_emb_table = jax.random.normal(k_emb, (NUM_USERS, U), dtype=jnp.float32)

    # Main run (with noise, bf16 matmuls).
    out = gnn_forward(A, hidden, users, user_emb_table, params,
                      clip_norm=CLIP_NORM, sigma=SIGMA, step=STEP,
                      seed=1234, use_bf16=True)
    out = jax.block_until_ready(out)
    assert out.shape == (B, N, D) and out.dtype == jnp.float32
    assert bool(jnp.all(jnp.isfinite(out)))

    # Deterministic correctness check against the pure-JAX reference (sigma=0, f32).
    out_det = gnn_forward(A, hidden, users, user_emb_table, params,
                          clip_norm=CLIP_NORM, sigma=0.0, step=STEP,
                          seed=0, use_bf16=False)
    out_det = jax.block_until_ready(out_det)
    ref = gnn_reference(A, hidden, users, user_emb_table, params,
                        clip_norm=CLIP_NORM, step=STEP)
    assert bool(jnp.allclose(out_det, ref, atol=2e-3, rtol=2e-3)), "mismatch vs reference"

    print("KERNEL_OK")
</pallas_src>

<mosaic_0001>
module attributes {stable_mosaic.version = 11 : i64} {
  func.func @_gnn_fused_kernel(%arg0: i32, %arg1: i32, %arg2: memref<2x8x8xf32, #tpu.memory_space<vmem>>, %arg3: memref<2x8x8xf32, #tpu.memory_space<vmem>>, %arg4: memref<2x8x32xf32, #tpu.memory_space<vmem>>, %arg5: memref<2x1x16xf32, #tpu.memory_space<vmem>>, %arg6: memref<1x2x8x48xf32, #tpu.memory_space<vmem>>, %arg7: memref<1x2x8x48xf32, #tpu.memory_space<vmem>>, %arg8: memref<2x48x32xbf16, #tpu.memory_space<vmem>>, %arg9: memref<2x1x32xf32, #tpu.memory_space<vmem>>, %arg10: memref<64x96xbf16, #tpu.memory_space<vmem>>, %arg11: memref<32x96xbf16, #tpu.memory_space<vmem>>, %arg12: memref<2x1x96xf32, #tpu.memory_space<vmem>>, %arg13: memref<2x8x32xf32, #tpu.memory_space<vmem>>, %arg14: memref<2x8x32xf32, #tpu.memory_space<vmem>>) attributes {dimension_semantics = [#tpu.dimension_semantics<parallel>, #tpu.dimension_semantics<arbitrary>], iteration_bounds = array<i64: 1, 2>, scalar_prefetch = 0 : i64, scratch_operands = 1 : i64, tpu.core_type = #tpu.core_type<tc>, window_params = [{transform_indices = @transform_0, window_bounds = array<i64: 2, 8, 8>}, {transform_indices = @transform_1, window_bounds = array<i64: 2, 8, 8>}, {transform_indices = @transform_2, window_bounds = array<i64: 2, 8, 32>}, {transform_indices = @transform_3, window_bounds = array<i64: 2, 1, 16>}, {transform_indices = @transform_4, window_bounds = array<i64: 1, 2, 8, 48>}, {transform_indices = @transform_5, window_bounds = array<i64: 1, 2, 8, 48>}, {pipeline_mode = #tpu.pipeline_mode<synchronous>, transform_indices = @transform_6, window_bounds = array<i64: 2, 48, 32>}, {pipeline_mode = #tpu.pipeline_mode<synchronous>, transform_indices = @transform_7, window_bounds = array<i64: 2, 1, 32>}, {pipeline_mode = #tpu.pipeline_mode<synchronous>, transform_indices = @transform_8, window_bounds = array<i64: 64, 96>}, {pipeline_mode = #tpu.pipeline_mode<synchronous>, transform_indices = @transform_9, window_bounds = array<i64: 32, 96>}, {pipeline_mode = #tpu.pipeline_mode<synchronous>, transform_indices = @transform_10, window_bounds = array<i64: 2, 1, 96>}, {transform_indices = @transform_11, window_bounds = array<i64: 2, 8, 32>}]} {
    %c0_i32 = arith.constant 0 : i32
    %0 = arith.cmpi eq, %arg1, %c0_i32 : i32
    %1 = arith.extui %0 : i1 to i32
    %c0_i32_0 = arith.constant 0 : i32
    %2 = arith.cmpi ne, %1, %c0_i32_0 : i32
    scf.if %2 {
      %c0_56 = arith.constant 0 : index
      %c0_57 = arith.constant 0 : index
      %c0_58 = arith.constant 0 : index
      %185 = vector.load %arg4[%c0_56, %c0_57, %c0_58] : memref<2x8x32xf32, #tpu.memory_space<vmem>>, vector<2x8x32xf32>
      %c0_59 = arith.constant 0 : index
      %c0_60 = arith.constant 0 : index
      %c0_61 = arith.constant 0 : index
      %186 = vector.load %arg14[%c0_59, %c0_60, %c0_61] : memref<2x8x32xf32, #tpu.memory_space<vmem>>, vector<2x8x32xf32>
      tpu.vector_store %arg14[%c0_59, %c0_60, %c0_61], %185 {strides = array<i32>} : memref<2x8x32xf32, #tpu.memory_space<vmem>>, vector<2x8x32xf32>,
    } else {
    }
    %c0 = arith.constant 0 : index
    %c0_1 = arith.constant 0 : index
    %c0_2 = arith.constant 0 : index
    %3 = vector.load %arg14[%c0, %c0_1, %c0_2] : memref<2x8x32xf32, #tpu.memory_space<vmem>>, vector<2x8x32xf32>
    %c0_3 = arith.constant 0 : index
    %c0_4 = arith.constant 0 : index
    %c0_5 = arith.constant 0 : index
    %4 = vector.load %arg5[%c0_3, %c0_4, %c0_5] : memref<2x1x16xf32, #tpu.memory_space<vmem>>, vector<2x1x16xf32>
    %5 = arith.mulf %3, %3 : vector<2x8x32xf32>
    %cst = arith.constant dense<0.000000e+00> : vector<2x8xf32>
    %6 = vector.multi_reduction <add>, %5, %cst [2] : vector<2x8x32xf32> to vector<2x8xf32>
    %7 = vector.shape_cast %6 : vector<2x8xf32> to vector<2x8x1xf32>
    %8 = arith.mulf %4, %4 : vector<2x1x16xf32>
    %cst_6 = arith.constant dense<0.000000e+00> : vector<2x1xf32>
    %9 = vector.multi_reduction <add>, %8, %cst_6 [2] : vector<2x1x16xf32> to vector<2x1xf32>
    %10 = vector.shape_cast %9 : vector<2x1xf32> to vector<2x1x1xf32>
    %11 = vector.broadcast %10 : vector<2x1x1xf32> to vector<2x8x1xf32>
    %12 = arith.addf %7, %11 : vector<2x8x1xf32>
    %cst_7 = arith.constant 1.000000e-24 : f32
    %13 = vector.broadcast %cst_7 : f32 to vector<2x8x1xf32>
    %14 = arith.maximumf %12, %13 : vector<2x8x1xf32>
    %15 = math.rsqrt %14 : vector<2x8x1xf32>
    %cst_8 = arith.constant 1.000000e+00 : f32
    %16 = vector.broadcast %cst_8 : f32 to vector<2x8x1xf32>
    %17 = arith.mulf %16, %15 : vector<2x8x1xf32>
    %18 = vector.broadcast %17 : vector<2x8x1xf32> to vector<2x8x32xf32>
    %19 = arith.mulf %3, %18 : vector<2x8x32xf32>
    %20 = vector.broadcast %4 : vector<2x1x16xf32> to vector<2x8x16xf32>
    %21 = vector.broadcast %17 : vector<2x8x1xf32> to vector<2x8x16xf32>
    %22 = arith.mulf %20, %21 : vector<2x8x16xf32>
    %23 = tpu.concatenate %19, %22 in 2 : vector<2x8x32xf32>, vector<2x8x16xf32> -> vector<2x8x48xf32>
    %c0_9 = arith.constant 0 : index
    %c0_10 = arith.constant 0 : index
    %c0_11 = arith.constant 0 : index
    %24 = vector.load %arg2[%c0_9, %c0_10, %c0_11] : memref<2x8x8xf32, #tpu.memory_space<vmem>>, vector<2x8x8xf32>
    %c0_12 = arith.constant 0 : index
    %c0_13 = arith.constant 0 : index
    %c0_14 = arith.constant 0 : index
    %25 = vector.load %arg3[%c0_12, %c0_13, %c0_14] : memref<2x8x8xf32, #tpu.memory_space<vmem>>, vector<2x8x8xf32>
    %cst_15 = arith.constant 0.000000e+00 : f32
    %26 = vector.broadcast %cst_15 : f32 to vector<2x8x48xf32>
    %cst_16 = arith.constant 0.000000e+00 : f32
    %27 = vector.broadcast %cst_16 : f32 to vector<2x8x48xf32>
    %28 = vector.extract_strided_slice %23 {offsets = [0, 0, 0], sizes = [2, 1, 48], strides = [1, 1, 1]} : vector<2x8x48xf32> to vector<2x1x48xf32>
    %29 = vector.extract_strided_slice %24 {offsets = [0, 0, 0], sizes = [2, 8, 1], strides = [1, 1, 1]} : vector<2x8x8xf32> to vector<2x8x1xf32>
    %30 = vector.broadcast %29 : vector<2x8x1xf32> to vector<2x8x48xf32>
    %31 = vector.broadcast %28 : vector<2x1x48xf32> to vector<2x8x48xf32>
    %32 = arith.mulf %30, %31 : vector<2x8x48xf32>
    %33 = arith.addf %26, %32 : vector<2x8x48xf32>
    %34 = vector.extract_strided_slice %25 {offsets = [0, 0, 0], sizes = [2, 8, 1], strides = [1, 1, 1]} : vector<2x8x8xf32> to vector<2x8x1xf32>
    %35 = vector.broadcast %34 : vector<2x8x1xf32> to vector<2x8x48xf32>
    %36 = vector.broadcast %28 : vector<2x1x48xf32> to vector<2x8x48xf32>
    %37 = arith.mulf %35, %36 : vector<2x8x48xf32>
    %38 = arith.addf %27, %37 : vector<2x8x48xf32>
    %39 = vector.extract_strided_slice %23 {offsets = [0, 1, 0], sizes = [2, 1, 48], strides = [1, 1, 1]} : vector<2x8x48xf32> to vector<2x1x48xf32>
    %40 = vector.extract_strided_slice %24 {offsets = [0, 0, 1], sizes = [2, 8, 1], strides = [1, 1, 1]} : vector<2x8x8xf32> to vector<2x8x1xf32>
    %41 = vector.broadcast %40 : vector<2x8x1xf32> to vector<2x8x48xf32>
    %42 = vector.broadcast %39 : vector<2x1x48xf32> to vector<2x8x48xf32>
    %43 = arith.mulf %41, %42 : vector<2x8x48xf32>
    %44 = arith.addf %33, %43 : vector<2x8x48xf32>
    %45 = vector.extract_strided_slice %25 {offsets = [0, 0, 1], sizes = [2, 8, 1], strides = [1, 1, 1]} : vector<2x8x8xf32> to vector<2x8x1xf32>
    %46 = vector.broadcast %45 : vector<2x8x1xf32> to vector<2x8x48xf32>
    %47 = vector.broadcast %39 : vector<2x1x48xf32> to vector<2x8x48xf32>
    %48 = arith.mulf %46, %47 : vector<2x8x48xf32>
    %49 = arith.addf %38, %48 : vector<2x8x48xf32>
    %50 = vector.extract_strided_slice %23 {offsets = [0, 2, 0], sizes = [2, 1, 48], strides = [1, 1, 1]} : vector<2x8x48xf32> to vector<2x1x48xf32>
    %51 = vector.extract_strided_slice %24 {offsets = [0, 0, 2], sizes = [2, 8, 1], strides = [1, 1, 1]} : vector<2x8x8xf32> to vector<2x8x1xf32>
    %52 = vector.broadcast %51 : vector<2x8x1xf32> to vector<2x8x48xf32>
    %53 = vector.broadcast %50 : vector<2x1x48xf32> to vector<2x8x48xf32>
    %54 = arith.mulf %52, %53 : vector<2x8x48xf32>
    %55 = arith.addf %44, %54 : vector<2x8x48xf32>
    %56 = vector.extract_strided_slice %25 {offsets = [0, 0, 2], sizes = [2, 8, 1], strides = [1, 1, 1]} : vector<2x8x8xf32> to vector<2x8x1xf32>
    %57 = vector.broadcast %56 : vector<2x8x1xf32> to vector<2x8x48xf32>
    %58 = vector.broadcast %50 : vector<2x1x48xf32> to vector<2x8x48xf32>
    %59 = arith.mulf %57, %58 : vector<2x8x48xf32>
    %60 = arith.addf %49, %59 : vector<2x8x48xf32>
    %61 = vector.extract_strided_slice %23 {offsets = [0, 3, 0], sizes = [2, 1, 48], strides = [1, 1, 1]} : vector<2x8x48xf32> to vector<2x1x48xf32>
    %62 = vector.extract_strided_slice %24 {offsets = [0, 0, 3], sizes = [2, 8, 1], strides = [1, 1, 1]} : vector<2x8x8xf32> to vector<2x8x1xf32>
    %63 = vector.broadcast %62 : vector<2x8x1xf32> to vector<2x8x48xf32>
    %64 = vector.broadcast %61 : vector<2x1x48xf32> to vector<2x8x48xf32>
    %65 = arith.mulf %63, %64 : vector<2x8x48xf32>
    %66 = arith.addf %55, %65 : vector<2x8x48xf32>
    %67 = vector.extract_strided_slice %25 {offsets = [0, 0, 3], sizes = [2, 8, 1], strides = [1, 1, 1]} : vector<2x8x8xf32> to vector<2x8x1xf32>
    %68 = vector.broadcast %67 : vector<2x8x1xf32> to vector<2x8x48xf32>
    %69 = vector.broadcast %61 : vector<2x1x48xf32> to vector<2x8x48xf32>
    %70 = arith.mulf %68, %69 : vector<2x8x48xf32>
    %71 = arith.addf %60, %70 : vector<2x8x48xf32>
    %72 = vector.extract_strided_slice %23 {offsets = [0, 4, 0], sizes = [2, 1, 48], strides = [1, 1, 1]} : vector<2x8x48xf32> to vector<2x1x48xf32>
    %73 = vector.extract_strided_slice %24 {offsets = [0, 0, 4], sizes = [2, 8, 1], strides = [1, 1, 1]} : vector<2x8x8xf32> to vector<2x8x1xf32>
    %74 = vector.broadcast %73 : vector<2x8x1xf32> to vector<2x8x48xf32>
    %75 = vector.broadcast %72 : vector<2x1x48xf32> to vector<2x8x48xf32>
    %76 = arith.mulf %74, %75 : vector<2x8x48xf32>
    %77 = arith.addf %66, %76 : vector<2x8x48xf32>
    %78 = vector.extract_strided_slice %25 {offsets = [0, 0, 4], sizes = [2, 8, 1], strides = [1, 1, 1]} : vector<2x8x8xf32> to vector<2x8x1xf32>
    %79 = vector.broadcast %78 : vector<2x8x1xf32> to vector<2x8x48xf32>
    %80 = vector.broadcast %72 : vector<2x1x48xf32> to vector<2x8x48xf32>
    %81 = arith.mulf %79, %80 : vector<2x8x48xf32>
    %82 = arith.addf %71, %81 : vector<2x8x48xf32>
    %83 = vector.extract_strided_slice %23 {offsets = [0, 5, 0], sizes = [2, 1, 48], strides = [1, 1, 1]} : vector<2x8x48xf32> to vector<2x1x48xf32>
    %84 = vector.extract_strided_slice %24 {offsets = [0, 0, 5], sizes = [2, 8, 1], strides = [1, 1, 1]} : vector<2x8x8xf32> to vector<2x8x1xf32>
    %85 = vector.broadcast %84 : vector<2x8x1xf32> to vector<2x8x48xf32>
    %86 = vector.broadcast %83 : vector<2x1x48xf32> to vector<2x8x48xf32>
    %87 = arith.mulf %85, %86 : vector<2x8x48xf32>
    %88 = arith.addf %77, %87 : vector<2x8x48xf32>
    %89 = vector.extract_strided_slice %25 {offsets = [0, 0, 5], sizes = [2, 8, 1], strides = [1, 1, 1]} : vector<2x8x8xf32> to vector<2x8x1xf32>
    %90 = vector.broadcast %89 : vector<2x8x1xf32> to vector<2x8x48xf32>
    %91 = vector.broadcast %83 : vector<2x1x48xf32> to vector<2x8x48xf32>
    %92 = arith.mulf %90, %91 : vector<2x8x48xf32>
    %93 = arith.addf %82, %92 : vector<2x8x48xf32>
    %94 = vector.extract_strided_slice %23 {offsets = [0, 6, 0], sizes = [2, 1, 48], strides = [1, 1, 1]} : vector<2x8x48xf32> to vector<2x1x48xf32>
    %95 = vector.extract_strided_slice %24 {offsets = [0, 0, 6], sizes = [2, 8, 1], strides = [1, 1, 1]} : vector<2x8x8xf32> to vector<2x8x1xf32>
    %96 = vector.broadcast %95 : vector<2x8x1xf32> to vector<2x8x48xf32>
    %97 = vector.broadcast %94 : vector<2x1x48xf32> to vector<2x8x48xf32>
    %98 = arith.mulf %96, %97 : vector<2x8x48xf32>
    %99 = arith.addf %88, %98 : vector<2x8x48xf32>
    %100 = vector.extract_strided_slice %25 {offsets = [0, 0, 6], sizes = [2, 8, 1], strides = [1, 1, 1]} : vector<2x8x8xf32> to vector<2x8x1xf32>
    %101 = vector.broadcast %100 : vector<2x8x1xf32> to vector<2x8x48xf32>
    %102 = vector.broadcast %94 : vector<2x1x48xf32> to vector<2x8x48xf32>
    %103 = arith.mulf %101, %102 : vector<2x8x48xf32>
    %104 = arith.addf %93, %103 : vector<2x8x48xf32>
    %105 = vector.extract_strided_slice %23 {offsets = [0, 7, 0], sizes = [2, 1, 48], strides = [1, 1, 1]} : vector<2x8x48xf32> to vector<2x1x48xf32>
    %106 = vector.extract_strided_slice %24 {offsets = [0, 0, 7], sizes = [2, 8, 1], strides = [1, 1, 1]} : vector<2x8x8xf32> to vector<2x8x1xf32>
    %107 = vector.broadcast %106 : vector<2x8x1xf32> to vector<2x8x48xf32>
    %108 = vector.broadcast %105 : vector<2x1x48xf32> to vector<2x8x48xf32>
    %109 = arith.mulf %107, %108 : vector<2x8x48xf32>
    %110 = arith.addf %99, %109 : vector<2x8x48xf32>
    %111 = vector.extract_strided_slice %25 {offsets = [0, 0, 7], sizes = [2, 8, 1], strides = [1, 1, 1]} : vector<2x8x8xf32> to vector<2x8x1xf32>
    %112 = vector.broadcast %111 : vector<2x8x1xf32> to vector<2x8x48xf32>
    %113 = vector.broadcast %105 : vector<2x1x48xf32> to vector<2x8x48xf32>
    %114 = arith.mulf %112, %113 : vector<2x8x48xf32>
    %115 = arith.addf %104, %114 : vector<2x8x48xf32>
    %c0_17 = arith.constant 0 : index
    %c0_18 = arith.constant 0 : index
    %c0_19 = arith.constant 0 : index
    %c0_20 = arith.constant 0 : index
    %116 = vector.load %arg6[%c0_17, %c0_18, %c0_19, %c0_20] : memref<1x2x8x48xf32, #tpu.memory_space<vmem>>, vector<1x2x8x48xf32>
    %117 = vector.shape_cast %116 : vector<1x2x8x48xf32> to vector<2x8x48xf32>
    %118 = arith.addf %110, %117 : vector<2x8x48xf32>
    %c0_21 = arith.constant 0 : index
    %c0_22 = arith.constant 0 : index
    %c0_23 = arith.constant 0 : index
    %c0_24 = arith.constant 0 : index
    %119 = vector.load %arg7[%c0_21, %c0_22, %c0_23, %c0_24] : memref<1x2x8x48xf32, #tpu.memory_space<vmem>>, vector<1x2x8x48xf32>
    %120 = vector.shape_cast %119 : vector<1x2x8x48xf32> to vector<2x8x48xf32>
    %121 = arith.addf %115, %120 : vector<2x8x48xf32>
    %122 = vector.shape_cast %118 : vector<2x8x48xf32> to vector<16x48xf32>
    %123 = arith.truncf %122 : vector<16x48xf32> to vector<16x48xbf16>
    %124 = vector.shape_cast %121 : vector<2x8x48xf32> to vector<16x48xf32>
    %125 = arith.truncf %124 : vector<16x48xf32> to vector<16x48xbf16>
    %c0_25 = arith.constant 0 : index
    %c0_26 = arith.constant 0 : index
    %c0_27 = arith.constant 0 : index
    %126 = vector.load %arg8[%c0_25, %c0_26, %c0_27] : memref<2x48x32xbf16, #tpu.memory_space<vmem>>, vector<1x48x32xbf16>
    %127 = vector.shape_cast %126 : vector<1x48x32xbf16> to vector<48x32xbf16>
    %cst_28 = arith.constant dense<0.000000e+00> : vector<16x32xf32>
    %128 = tpu.matmul %123, %127, %cst_28 {dimension_numbers = #tpu.dot_dimension_numbers<[1], [0], [0], [1], [0, 0, 1, 1], [], []>} : vector<16x48xbf16>, vector<48x32xbf16>, vector<16x32xf32> -> vector<16x32xf32>
    %c0_29 = arith.constant 0 : index
    %c0_30 = arith.constant 0 : index
    %c0_31 = arith.constant 0 : index
    %129 = vector.load %arg9[%c0_29, %c0_30, %c0_31] : memref<2x1x32xf32, #tpu.memory_space<vmem>>, vector<1x1x32xf32>
    %130 = vector.shape_cast %129 : vector<1x1x32xf32> to vector<1x32xf32>
    %131 = vector.broadcast %130 : vector<1x32xf32> to vector<16x32xf32>
    %132 = arith.addf %128, %131 : vector<16x32xf32>
    %c1 = arith.constant 1 : index
    %c0_32 = arith.constant 0 : index
    %c0_33 = arith.constant 0 : index
    %133 = vector.load %arg8[%c1, %c0_32, %c0_33] : memref<2x48x32xbf16, #tpu.memory_space<vmem>>, vector<1x48x32xbf16>
    %134 = vector.shape_cast %133 : vector<1x48x32xbf16> to vector<48x32xbf16>
    %cst_34 = arith.constant dense<0.000000e+00> : vector<16x32xf32>
    %135 = tpu.matmul %125, %134, %cst_34 {dimension_numbers = #tpu.dot_dimension_numbers<[1], [0], [0], [1], [0, 0, 1, 1], [], []>} : vector<16x48xbf16>, vector<48x32xbf16>, vector<16x32xf32> -> vector<16x32xf32>
    %c1_35 = arith.constant 1 : index
    %c0_36 = arith.constant 0 : index
    %c0_37 = arith.constant 0 : index
    %136 = vector.load %arg9[%c1_35, %c0_36, %c0_37] : memref<2x1x32xf32, #tpu.memory_space<vmem>>, vector<1x1x32xf32>
    %137 = vector.shape_cast %136 : vector<1x1x32xf32> to vector<1x32xf32>
    %138 = vector.broadcast %137 : vector<1x32xf32> to vector<16x32xf32>
    %139 = arith.addf %135, %138 : vector<16x32xf32>
    %140 = tpu.concatenate %132, %139 in 1 : vector<16x32xf32>, vector<16x32xf32> -> vector<16x64xf32>
    %141 = arith.truncf %140 : vector<16x64xf32> to vector<16x64xbf16>
    %142 = vector.shape_cast %19 : vector<2x8x32xf32> to vector<16x32xf32>
    %c0_38 = arith.constant 0 : index
    %c0_39 = arith.constant 0 : index
    %143 = vector.load %arg10[%c0_38, %c0_39] : memref<64x96xbf16, #tpu.memory_space<vmem>>, vector<64x96xbf16>
    %cst_40 = arith.constant dense<0.000000e+00> : vector<16x96xf32>
    %144 = tpu.matmul %141, %143, %cst_40 {dimension_numbers = #tpu.dot_dimension_numbers<[1], [0], [0], [1], [0, 0, 1, 1], [], []>} : vector<16x64xbf16>, vector<64x96xbf16>, vector<16x96xf32> -> vector<16x96xf32>
    %c0_41 = arith.constant 0 : index
    %c0_42 = arith.constant 0 : index
    %c0_43 = arith.constant 0 : index
    %145 = vector.load %arg12[%c0_41, %c0_42, %c0_43] : memref<2x1x96xf32, #tpu.memory_space<vmem>>, vector<1x1x96xf32>
    %146 = vector.shape_cast %145 : vector<1x1x96xf32> to vector<1x96xf32>
    %147 = vector.broadcast %146 : vector<1x96xf32> to vector<16x96xf32>
    %148 = arith.addf %144, %147 : vector<16x96xf32>
    %149 = arith.truncf %142 : vector<16x32xf32> to vector<16x32xbf16>
    %c0_44 = arith.constant 0 : index
    %c0_45 = arith.constant 0 : index
    %150 = vector.load %arg11[%c0_44, %c0_45] : memref<32x96xbf16, #tpu.memory_space<vmem>>, vector<32x96xbf16>
    %cst_46 = arith.constant dense<0.000000e+00> : vector<16x96xf32>
    %151 = tpu.matmul %149, %150, %cst_46 {dimension_numbers = #tpu.dot_dimension_numbers<[1], [0], [0], [1], [0, 0, 1, 1], [], []>} : vector<16x32xbf16>, vector<32x96xbf16>, vector<16x96xf32> -> vector<16x96xf32>
    %c1_47 = arith.constant 1 : index
    %c0_48 = arith.constant 0 : index
    %c0_49 = arith.constant 0 : index
    %152 = vector.load %arg12[%c1_47, %c0_48, %c0_49] : memref<2x1x96xf32, #tpu.memory_space<vmem>>, vector<1x1x96xf32>
    %153 = vector.shape_cast %152 : vector<1x1x96xf32> to vector<1x96xf32>
    %154 = vector.broadcast %153 : vector<1x96xf32> to vector<16x96xf32>
    %155 = arith.addf %151, %154 : vector<16x96xf32>
    %156 = vector.extract_strided_slice %148 {offsets = [0, 0], sizes = [16, 32], strides = [1, 1]} : vector<16x96xf32> to vector<16x32xf32>
    %157 = vector.extract_strided_slice %148 {offsets = [0, 32], sizes = [16, 32], strides = [1, 1]} : vector<16x96xf32> to vector<16x32xf32>
    %158 = vector.extract_strided_slice %148 {offsets = [0, 64], sizes = [16, 32], strides = [1, 1]} : vector<16x96xf32> to vector<16x32xf32>
    %159 = vector.extract_strided_slice %155 {offsets = [0, 0], sizes = [16, 32], strides = [1, 1]} : vector<16x96xf32> to vector<16x32xf32>
    %160 = vector.extract_strided_slice %155 {offsets = [0, 32], sizes = [16, 32], strides = [1, 1]} : vector<16x96xf32> to vector<16x32xf32>
    %161 = vector.extract_strided_slice %155 {offsets = [0, 64], sizes = [16, 32], strides = [1, 1]} : vector<16x96xf32> to vector<16x32xf32>
    %162 = arith.addf %156, %159 : vector<16x32xf32>
    %163 = arith.negf %162 : vector<16x32xf32>
    %164 = math.exp %163 : vector<16x32xf32>
    %cst_50 = arith.constant 1.000000e+00 : f32
    %165 = vector.broadcast %cst_50 : f32 to vector<16x32xf32>
    %166 = arith.addf %165, %164 : vector<16x32xf32>
    %167 = arith.divf %165, %166 : vector<16x32xf32>
    %168 = arith.addf %157, %160 : vector<16x32xf32>
    %169 = arith.negf %168 : vector<16x32xf32>
    %170 = math.exp %169 : vector<16x32xf32>
    %cst_51 = arith.constant 1.000000e+00 : f32
    %171 = vector.broadcast %cst_51 : f32 to vector<16x32xf32>
    %172 = arith.addf %171, %170 : vector<16x32xf32>
    %173 = arith.divf %171, %172 : vector<16x32xf32>
    %174 = arith.mulf %167, %161 : vector<16x32xf32>
    %175 = arith.addf %158, %174 : vector<16x32xf32>
    %176 = math.tanh %175 : vector<16x32xf32>
    %177 = arith.subf %176, %142 : vector<16x32xf32>
    %178 = arith.mulf %173, %177 : vector<16x32xf32>
    %179 = arith.addf %142, %178 : vector<16x32xf32>
    %180 = vector.shape_cast %179 : vector<16x32xf32> to vector<2x8x32xf32>
    %c0_52 = arith.constant 0 : index
    %c0_53 = arith.constant 0 : index
    %c0_54 = arith.constant 0 : index
    %181 = vector.load %arg14[%c0_52, %c0_53, %c0_54] : memref<2x8x32xf32, #tpu.memory_space<vmem>>, vector<2x8x32xf32>
    tpu.vector_store %arg14[%c0_52, %c0_53, %c0_54], %180 {strides = array<i32>} : memref<2x8x32xf32, #tpu.memory_space<vmem>>, vector<2x8x32xf32>,
    %c1_i32 = arith.constant 1 : i32
    %182 = arith.cmpi eq, %arg1, %c1_i32 : i32
    %183 = arith.extui %182 : i1 to i32
    %c0_i32_55 = arith.constant 0 : i32
    %184 = arith.cmpi ne, %183, %c0_i32_55 : i32
    scf.if %184 {
      %c0_56 = arith.constant 0 : index
      %c0_57 = arith.constant 0 : index
      %c0_58 = arith.constant 0 : index
      %185 = vector.load %arg13[%c0_56, %c0_57, %c0_58] : memref<2x8x32xf32, #tpu.memory_space<vmem>>, vector<2x8x32xf32>
      tpu.vector_store %arg13[%c0_56, %c0_57, %c0_58], %180 {strides = array<i32>} : memref<2x8x32xf32, #tpu.memory_space<vmem>>, vector<2x8x32xf32>,
    } else {
    }
    return
  }
  func.func @transform_0(%arg0: i32, %arg1: i32) -> (i32, i32, i32) {
    %c0_i32 = arith.constant 0 : i32
    %c0_i32_0 = arith.constant 0 : i32
    %c0_i32_1 = arith.constant 0 : i32
    return %arg0, %c0_i32, %c0_i32_0 : i32, i32, i32
  }
  func.func @transform_1(%arg0: i32, %arg1: i32) -> (i32, i32, i32) {
    %c0_i32 = arith.constant 0 : i32
    %c0_i32_0 = arith.constant 0 : i32
    %c0_i32_1 = arith.constant 0 : i32
    return %arg0, %c0_i32, %c0_i32_0 : i32, i32, i32
  }
  func.func @transform_2(%arg0: i32, %arg1: i32) -> (i32, i32, i32) {
    %c0_i32 = arith.constant 0 : i32
    %c0_i32_0 = arith.constant 0 : i32
    %c0_i32_1 = arith.constant 0 : i32
    return %arg0, %c0_i32, %c0_i32_0 : i32, i32, i32
  }
  func.func @transform_3(%arg0: i32, %arg1: i32) -> (i32, i32, i32) {
    %c0_i32 = arith.constant 0 : i32
    %c0_i32_0 = arith.constant 0 : i32
    %c0_i32_1 = arith.constant 0 : i32
    return %arg0, %c0_i32, %c0_i32_0 : i32, i32, i32
  }
  func.func @transform_4(%arg0: i32, %arg1: i32) -> (i32, i32, i32, i32) {
    %c0_i32 = arith.constant 0 : i32
    %c0_i32_0 = arith.constant 0 : i32
    %c0_i32_1 = arith.constant 0 : i32
    return %arg1, %arg0, %c0_i32, %c0_i32_0 : i32, i32, i32, i32
  }
  func.func @transform_5(%arg0: i32, %arg1: i32) -> (i32, i32, i32, i32) {
    %c0_i32 = arith.constant 0 : i32
    %c0_i32_0 = arith.constant 0 : i32
    %c0_i32_1 = arith.constant 0 : i32
    return %arg1, %arg0, %c0_i32, %c0_i32_0 : i32, i32, i32, i32
  }
  func.func @transform_6(%arg0: i32, %arg1: i32) -> (i32, i32, i32) {
    %c0_i32 = arith.constant 0 : i32
    %c0_i32_0 = arith.constant 0 : i32
    %c0_i32_1 = arith.constant 0 : i32
    %c0_i32_2 = arith.constant 0 : i32
    return %c0_i32, %c0_i32_0, %c0_i32_1 : i32, i32, i32
  }
  func.func @transform_7(%arg0: i32, %arg1: i32) -> (i32, i32, i32) {
    %c0_i32 = arith.constant 0 : i32
    %c0_i32_0 = arith.constant 0 : i32
    %c0_i32_1 = arith.constant 0 : i32
    %c0_i32_2 = arith.constant 0 : i32
    return %c0_i32, %c0_i32_0, %c0_i32_1 : i32, i32, i32
  }
  func.func @transform_8(%arg0: i32, %arg1: i32) -> (i32, i32) {
    %c0_i32 = arith.constant 0 : i32
    %c0_i32_0 = arith.constant 0 : i32
    %c0_i32_1 = arith.constant 0 : i32
    return %c0_i32, %c0_i32_0 : i32, i32
  }
  func.func @transform_9(%arg0: i32, %arg1: i32) -> (i32, i32) {
    %c0_i32 = arith.constant 0 : i32
    %c0_i32_0 = arith.constant 0 : i32
    %c0_i32_1 = arith.constant 0 : i32
    return %c0_i32, %c0_i32_0 : i32, i32
  }
  func.func @transform_10(%arg0: i32, %arg1: i32) -> (i32, i32, i32) {
    %c0_i32 = arith.constant 0 : i32
    %c0_i32_0 = arith.constant 0 : i32
    %c0_i32_1 = arith.constant 0 : i32
    %c0_i32_2 = arith.constant 0 : i32
    return %c0_i32, %c0_i32_0, %c0_i32_1 : i32, i32, i32
  }
  func.func @transform_11(%arg0: i32, %arg1: i32) -> (i32, i32, i32) {
    %c0_i32 = arith.constant 0 : i32
    %c0_i32_0 = arith.constant 0 : i32
    %c0_i32_1 = arith.constant 0 : i32
    return %arg0, %c0_i32, %c0_i32_0 : i32, i32, i32
  }
}

</mosaic_0001>

<llo_original>
// kernel: tpu_custom_call.1
$region0: #{tpu_custom_call.1}
  #allocation0 [shape = 'u32[]', space=smem, size = 0x4, offset = 0x4, fixed_abs, tag = 'smem constant byte address 0x4 - core index']
  #allocation1 [shape = 'u32[144,128]{1,0:T(1,128)}', space=vmem, size = 0x12000, scoped, tag = 'internal scratch']
  #allocation2 [shape = 'f32[2,8,32]{2,1,0:T(8,128)}', space=vmem, size = 0x2000, scoped, tag = 'scratch operand']
  %s0 = inlined_call_operand.hbm [shape: f32[2,8,8], index: 0, kind: input, shape index: {}]
  %s1 = inlined_call_operand.hbm [shape: f32[2,8,8], index: 1, kind: input, shape index: {}]
  %s2 = inlined_call_operand.hbm [shape: f32[2,8,32], index: 2, kind: input, shape index: {}]
  %s3 = inlined_call_operand.vmem [shape: f32[2,1,16], index: 3, kind: input, shape index: {}]
  %s4 = inlined_call_operand.vmem [shape: f32[2,2,8,48], index: 4, kind: input, shape index: {}]
  %s5 = inlined_call_operand.vmem [shape: f32[2,2,8,48], index: 5, kind: input, shape index: {}]
  %s6 = inlined_call_operand.vmem [shape: bf16[2,48,32], index: 6, kind: input, shape index: {}]
  %s7 = inlined_call_operand.hbm [shape: f32[2,1,32], index: 7, kind: input, shape index: {}]
  %s8 = inlined_call_operand.vmem [shape: bf16[64,96], index: 8, kind: input, shape index: {}]
  %s9 = inlined_call_operand.vmem [shape: bf16[32,96], index: 9, kind: input, shape index: {}]
  %s10 = inlined_call_operand.vmem [shape: f32[2,1,96], index: 10, kind: input, shape index: {}]
  %s11 = inlined_call_operand.hbm [shape: f32[2,8,32], index: 11, kind: output, shape index: {}]
  %s12 = sld [smem:[#allocation0]]
  $region101: #{tpu_custom_call.1} parent=0
    _
  %s14 = ssub.s32 1, %s12
  %s15 = scalar_select 0, %s14, %s12
  $region1: #{tpu_custom_call.1} parent=0
    #allocation3 [shape = 'u8[8192]{0}', space=vmem, size = 0x2000, scoped, tag = 'input window, operand 0, single buffered']
    #allocation4 [shape = 's32[2]{0}', space=sflag, size = 0x8, scoped, tag = 'scoped memory for tpu_custom_call.1']
    #allocation5 [shape = 's32[2]{0}', space=sflag, size = 0x8, scoped, tag = 'scoped memory for tpu_custom_call.1']
    #allocation6 [shape = 'u8[8192]{0}', space=vmem, size = 0x2000, scoped, tag = 'input window, operand 1, single buffered']
    #allocation7 [shape = 's32[1]{0}', space=sflag, size = 0x4, scoped, tag = 'scoped memory for tpu_custom_call.1']
    #allocation8 [shape = 'u8[8192]{0}', space=vmem, size = 0x2000, scoped, tag = 'input window, operand 2, single buffered']
    #allocation9 [shape = 'u8[1024]{0}', space=vmem, size = 0x400, scoped, tag = 'input window, operand 7, single buffered']
    #allocation10 [shape = 's32[1]{0}', space=sflag, size = 0x4, scoped, tag = 'scoped memory for tpu_custom_call.1']
    #allocation11 [shape = 'u8[8192]{0}', space=vmem, size = 0x2000, scoped, tag = 'output window, operand 0, single buffered']
    %16 = vsyncpa [#allocation4], 0
    %17 = vsyncpa [#allocation7], 0
    %18 = vsyncpa [#allocation10], 0
    %19 = vsyncpa [#allocation5], 0
    loop: start=0, step=1, limit=4
    $region2: #{tpu_custom_call.1} parent=1 // loop_pre_header
      _
    $region3: #{tpu_custom_call.1} parent=1 // loop_header
      %s21 = sphi 0, %s25
      %p22 = scmp.ge.s32.totalorder %s21, 4
      %s28 = sphi 0, %s40
      %s29 = sphi 0, %s36
      %s30 = sphi 0, %s28
      %s31 = sphi 0, %s29
      %s32 = sphi 0, %s30
      %s33 = sphi 0, %s31
      %s43 = sphi 0, %s45
      %s46 = sphi 0, %s43
      %s47 = sphi 0, %s46
      %s63 = sphi 0, %s47
      %s69 = sphi 0, %s71
      %s72 = sphi 0, %s69
      %s73 = sphi 0, %s72
      %s89 = sphi 0, %s73
      %s95 = sphi 0, %s97
      %s98 = sphi 0, %s95
      %s99 = sphi 0, %s98
      %s115 = sphi 0, %s99
      %s121 = sphi 0, %s123
      %s124 = sphi 0, %s121
      %s125 = sphi 0, %s124
      %s141 = sphi 0, %s125
      %s149 = sphi 0, %s151
      %s152 = sphi 0, %s149
      %s153 = sphi 0, %s152
      %s169 = sphi 0, %s153
      %s177 = sphi 0, %s179
      %s180 = sphi 0, %s177
      %s181 = sphi 0, %s180
      %s197 = sphi 0, %s181
      %s201 = sphi 0, %s201
      %s203 = sphi 0, %s201
      %s204 = sphi 0, %s203
      %s218 = sphi 0, %s204
      %s222 = sphi 0, %s222
      %s224 = sphi 0, %s222
      %s225 = sphi 0, %s224
      %s239 = sphi 0, %s225
      %s243 = sphi 0, %s243
      %s245 = sphi 0, %s243
      %s246 = sphi 0, %s245
      %s260 = sphi 0, %s246
      %s264 = sphi 0, %s264
      %s266 = sphi 0, %s264
      %s267 = sphi 0, %s266
      %s281 = sphi 0, %s267
      %s285 = sphi 0, %s285
      %s287 = sphi 0, %s285
      %s288 = sphi 0, %s287
      %s302 = sphi 0, %s288
      %s308 = sphi 0, %s310
      %s311 = sphi 0, %s308
      %s312 = sphi 0, %s311
      %s328 = sphi 0, %s312
    $region4: #{tpu_custom_call.1} parent=1 // loop_header_branch
      %24 = sbr.rel (%p22) target = $region8
    $region5: #{tpu_custom_call.1} parent=1 // loop_body
      %s26 = ssub.s32 %s21, 1
      %s27 = ssub.s32 %s21, 2
      %s34 = sadd.s32 1, %s29
      %p35 = scmp.ge.s32.totalorder %s34, 2
      %s36 = scalar_select %p35, 0, %s34
      %s37 = sadd.s32 1, %s28
      %s38 = scalar_select %p35, %s37, %s28
      %p39 = scmp.ge.s32.totalorder %s38, 1
      %s40 = scalar_select %p39, 0, %s38
      %s41 = ssub.s32 %s28, %s40
      %p42 = scmp.eq.s32.totalorder %s41, 0
      %s44 = sadd.s32 %s43, 1
      %s45 = scalar_select %p42, %s43, %s44
      %p48 = pneg %p42
      %p49 = scmp.eq.s32.totalorder %s21, 1
      %p50 = por %p48, %p49
      %p51 = scmp.ne.s32.totalorder %s43, %s46
      %p52 = scmp.eq.s32.totalorder %s21, 0
      %p53 = por %p51, %p52
      %p54 = scmp.ne.s32.totalorder %s43, %s46
      %p55 = scmp.eq.s32.totalorder %s26, 1
      %p56 = por %p54, %p55
      %p57 = scmp.ne.s32.totalorder %s46, %s47
      %p58 = scmp.eq.s32.totalorder %s26, 0
      %p59 = por %p57, %p58
      %p60 = scmp.ne.s32.totalorder %s46, %s47
      %p61 = scmp.eq.s32.totalorder %s27, 1
      %p62 = por %p60, %p61
      %p64 = scmp.ne.s32.totalorder %s47, %s63
      %p65 = scmp.eq.s32.totalorder %s27, 0
      %p66 = por %p64, %p65
      %s67 = ssub.s32 %s28, %s40
      %p68 = scmp.eq.s32.totalorder %s67, 0
      %s70 = sadd.s32 %s69, 1
      %s71 = scalar_select %p68, %s69, %s70
      %p74 = pneg %p68
      %p75 = scmp.eq.s32.totalorder %s21, 1
      %p76 = por %p74, %p75
      %p77 = scmp.ne.s32.totalorder %s69, %s72
      %p78 = scmp.eq.s32.totalorder %s21, 0
      %p79 = por %p77, %p78
      %p80 = scmp.ne.s32.totalorder %s69, %s72
      %p81 = scmp.eq.s32.totalorder %s26, 1
      %p82 = por %p80, %p81
      %p83 = scmp.ne.s32.totalorder %s72, %s73
      %p84 = scmp.eq.s32.totalorder %s26, 0
      %p85 = por %p83, %p84
      %p86 = scmp.ne.s32.totalorder %s72, %s73
      %p87 = scmp.eq.s32.totalorder %s27, 1
      %p88 = por %p86, %p87
      %p90 = scmp.ne.s32.totalorder %s73, %s89
      %p91 = scmp.eq.s32.totalorder %s27, 0
      %p92 = por %p90, %p91
      %s93 = ssub.s32 %s28, %s40
      %p94 = scmp.eq.s32.totalorder %s93, 0
      %s96 = sadd.s32 %s95, 1
      %s97 = scalar_select %p94, %s95, %s96
      %p100 = pneg %p94
      %p101 = scmp.eq.s32.totalorder %s21, 1
      %p102 = por %p100, %p101
      %p103 = scmp.ne.s32.totalorder %s95, %s98
      %p104 = scmp.eq.s32.totalorder %s21, 0
      %p105 = por %p103, %p104
      %p106 = scmp.ne.s32.totalorder %s95, %s98
      %p107 = scmp.eq.s32.totalorder %s26, 1
      %p108 = por %p106, %p107
      %p109 = scmp.ne.s32.totalorder %s98, %s99
      %p110 = scmp.eq.s32.totalorder %s26, 0
      %p111 = por %p109, %p110
      %p112 = scmp.ne.s32.totalorder %s98, %s99
      %p113 = scmp.eq.s32.totalorder %s27, 1
      %p114 = por %p112, %p113
      %p116 = scmp.ne.s32.totalorder %s99, %s115
      %p117 = scmp.eq.s32.totalorder %s27, 0
      %p118 = por %p116, %p117
      %s119 = ssub.s32 %s28, %s40
      %p120 = scmp.eq.s32.totalorder %s119, 0
      %s122 = sadd.s32 %s121, 1
      %s123 = scalar_select %p120, %s121, %s122
      %p126 = pneg %p120
      %p127 = scmp.eq.s32.totalorder %s21, 1
      %p128 = por %p126, %p127
      %p129 = scmp.ne.s32.totalorder %s121, %s124
      %p130 = scmp.eq.s32.totalorder %s21, 0
      %p131 = por %p129, %p130
      %p132 = scmp.ne.s32.totalorder %s121, %s124
      %p133 = scmp.eq.s32.totalorder %s26, 1
      %p134 = por %p132, %p133
      %p135 = scmp.ne.s32.totalorder %s124, %s125
      %p136 = scmp.eq.s32.totalorder %s26, 0
      %p137 = por %p135, %p136
      %p138 = scmp.ne.s32.totalorder %s124, %s125
      %p139 = scmp.eq.s32.totalorder %s27, 1
      %p140 = por %p138, %p139
      %p142 = scmp.ne.s32.totalorder %s125, %s141
      %p143 = scmp.eq.s32.totalorder %s27, 0
      %p144 = por %p142, %p143
      %s145 = ssub.s32 %s29, %s36
      %s146 = ssub.s32 %s28, %s40
      %s147 = sor.u32 %s145, %s146
      %p148 = scmp.eq.s32.totalorder %s147, 0
      %s150 = sadd.s32 %s149, 1
      %s151 = scalar_select %p148, %s149, %s150
      %p154 = pneg %p148
      %p155 = scmp.eq.s32.totalorder %s21, 1
      %p156 = por %p154, %p155
      %p157 = scmp.ne.s32.totalorder %s149, %s152
      %p158 = scmp.eq.s32.totalorder %s21, 0
      %p159 = por %p157, %p158
      %p160 = scmp.ne.s32.totalorder %s149, %s152
      %p161 = scmp.eq.s32.totalorder %s26, 1
      %p162 = por %p160, %p161
      %p163 = scmp.ne.s32.totalorder %s152, %s153
      %p164 = scmp.eq.s32.totalorder %s26, 0
      %p165 = por %p163, %p164
      %p166 = scmp.ne.s32.totalorder %s152, %s153
      %p167 = scmp.eq.s32.totalorder %s27, 1
      %p168 = por %p166, %p167
      %p170 = scmp.ne.s32.totalorder %s153, %s169
      %p171 = scmp.eq.s32.totalorder %s27, 0
      %p172 = por %p170, %p171
      %s173 = ssub.s32 %s29, %s36
      %s174 = ssub.s32 %s28, %s40
      %s175 = sor.u32 %s173, %s174
      %p176 = scmp.eq.s32.totalorder %s175, 0
      %s178 = sadd.s32 %s177, 1
      %s179 = scalar_select %p176, %s177, %s178
      %p182 = pneg %p176
      %p183 = scmp.eq.s32.totalorder %s21, 1
      %p184 = por %p182, %p183
      %p185 = scmp.ne.s32.totalorder %s177, %s180
      %p186 = scmp.eq.s32.totalorder %s21, 0
      %p187 = por %p185, %p186
      %p188 = scmp.ne.s32.totalorder %s177, %s180
      %p189 = scmp.eq.s32.totalorder %s26, 1
      %p190 = por %p188, %p189
      %p191 = scmp.ne.s32.totalorder %s180, %s181
      %p192 = scmp.eq.s32.totalorder %s26, 0
      %p193 = por %p191, %p192
      %p194 = scmp.ne.s32.totalorder %s180, %s181
      %p195 = scmp.eq.s32.totalorder %s27, 1
      %p196 = por %p194, %p195
      %p198 = scmp.ne.s32.totalorder %s181, %s197
      %p199 = scmp.eq.s32.totalorder %s27, 0
      %p200 = por %p198, %p199
      %s202 = sadd.s32 %s201, 1
      %p205 = scmp.eq.s32.totalorder %s21, 1
      %p206 = scmp.ne.s32.totalorder %s201, %s203
      %p207 = scmp.eq.s32.totalorder %s21, 0
      %p208 = por %p206, %p207
      %p209 = scmp.ne.s32.totalorder %s201, %s203
      %p210 = scmp.eq.s32.totalorder %s26, 1
      %p211 = por %p209, %p210
      %p212 = scmp.ne.s32.totalorder %s203, %s204
      %p213 = scmp.eq.s32.totalorder %s26, 0
      %p214 = por %p212, %p213
      %p215 = scmp.ne.s32.totalorder %s203, %s204
      %p216 = scmp.eq.s32.totalorder %s27, 1
      %p217 = por %p215, %p216
      %p219 = scmp.ne.s32.totalorder %s204, %s218
      %p220 = scmp.eq.s32.totalorder %s27, 0
      %p221 = por %p219, %p220
      %s223 = sadd.s32 %s222, 1
      %p226 = scmp.eq.s32.totalorder %s21, 1
      %p227 = scmp.ne.s32.totalorder %s222, %s224
      %p228 = scmp.eq.s32.totalorder %s21, 0
      %p229 = por %p227, %p228
      %p230 = scmp.ne.s32.totalorder %s222, %s224
      %p231 = scmp.eq.s32.totalorder %s26, 1
      %p232 = por %p230, %p231
      %p233 = scmp.ne.s32.totalorder %s224, %s225
      %p234 = scmp.eq.s32.totalorder %s26, 0
      %p235 = por %p233, %p234
      %p236 = scmp.ne.s32.totalorder %s224, %s225
      %p237 = scmp.eq.s32.totalorder %s27, 1
      %p238 = por %p236, %p237
      %p240 = scmp.ne.s32.totalorder %s225, %s239
      %p241 = scmp.eq.s32.totalorder %s27, 0
      %p242 = por %p240, %p241
      %s244 = sadd.s32 %s243, 1
      %p247 = scmp.eq.s32.totalorder %s21, 1
      %p248 = scmp.ne.s32.totalorder %s243, %s245
      %p249 = scmp.eq.s32.totalorder %s21, 0
      %p250 = por %p248, %p249
      %p251 = scmp.ne.s32.totalorder %s243, %s245
      %p252 = scmp.eq.s32.totalorder %s26, 1
      %p253 = por %p251, %p252
      %p254 = scmp.ne.s32.totalorder %s245, %s246
      %p255 = scmp.eq.s32.totalorder %s26, 0
      %p256 = por %p254, %p255
      %p257 = scmp.ne.s32.totalorder %s245, %s246
      %p258 = scmp.eq.s32.totalorder %s27, 1
      %p259 = por %p257, %p258
      %p261 = scmp.ne.s32.totalorder %s246, %s260
      %p262 = scmp.eq.s32.totalorder %s27, 0
      %p263 = por %p261, %p262
      %s265 = sadd.s32 %s264, 1
      %p268 = scmp.eq.s32.totalorder %s21, 1
      %p269 = scmp.ne.s32.totalorder %s264, %s266
      %p270 = scmp.eq.s32.totalorder %s21, 0
      %p271 = por %p269, %p270
      %p272 = scmp.ne.s32.totalorder %s264, %s266
      %p273 = scmp.eq.s32.totalorder %s26, 1
      %p274 = por %p272, %p273
      %p275 = scmp.ne.s32.totalorder %s266, %s267
      %p276 = scmp.eq.s32.totalorder %s26, 0
      %p277 = por %p275, %p276
      %p278 = scmp.ne.s32.totalorder %s266, %s267
      %p279 = scmp.eq.s32.totalorder %s27, 1
      %p280 = por %p278, %p279
      %p282 = scmp.ne.s32.totalorder %s267, %s281
      %p283 = scmp.eq.s32.totalorder %s27, 0
      %p284 = por %p282, %p283
      %s286 = sadd.s32 %s285, 1
      %p289 = scmp.eq.s32.totalorder %s21, 1
      %p290 = scmp.ne.s32.totalorder %s285, %s287
      %p291 = scmp.eq.s32.totalorder %s21, 0
      %p292 = por %p290, %p291
      %p293 = scmp.ne.s32.totalorder %s285, %s287
      %p294 = scmp.eq.s32.totalorder %s26, 1
      %p295 = por %p293, %p294
      %p296 = scmp.ne.s32.totalorder %s287, %s288
      %p297 = scmp.eq.s32.totalorder %s26, 0
      %p298 = por %p296, %p297
      %p299 = scmp.ne.s32.totalorder %s287, %s288
      %p300 = scmp.eq.s32.totalorder %s27, 1
      %p301 = por %p299, %p300
      %p303 = scmp.ne.s32.totalorder %s288, %s302
      %p304 = scmp.eq.s32.totalorder %s27, 0
      %p305 = por %p303, %p304
      %s306 = ssub.s32 %s28, %s40
      %p307 = scmp.eq.s32.totalorder %s306, 0
      %s309 = sadd.s32 %s308, 1
      %s310 = scalar_select %p307, %s308, %s309
      %p313 = pneg %p307
      %p314 = scmp.eq.s32.totalorder %s21, 1
      %p315 = por %p313, %p314
      %p316 = scmp.ne.s32.totalorder %s308, %s311
      %p317 = scmp.eq.s32.totalorder %s21, 0
      %p318 = por %p316, %p317
      %p319 = scmp.ne.s32.totalorder %s308, %s311
      %p320 = scmp.eq.s32.totalorder %s26, 1
      %p321 = por %p319, %p320
      %p322 = scmp.ne.s32.totalorder %s311, %s312
      %p323 = scmp.eq.s32.totalorder %s26, 0
      %p324 = por %p322, %p323
      %p325 = scmp.ne.s32.totalorder %s311, %s312
      %p326 = scmp.eq.s32.totalorder %s27, 1
      %p327 = por %p325, %p326
      %p329 = scmp.ne.s32.totalorder %s312, %s328
      %p330 = scmp.eq.s32.totalorder %s27, 0
      %p331 = por %p329, %p330
      %p332 = scmp.le.s32.totalorder 1, %s21
      %p333 = scmp.lt.s32.totalorder %s21, 3
      %p334 = pnand %p332, %p333
      %p335 = pneg %p334
      // Predicated region
      $region9: #{tpu_custom_call.1} parent=5 // pred_check
        _
      $region10: #{tpu_custom_call.1} parent=5 // pred_check_branch
        %337 = sbr.rel (%p334) target = $region12
      $region11: #{tpu_custom_call.1} parent=5 // pred_region
        %s338 = ssub.s32 %s21, 1
        // Predicated region
        $region13: #{tpu_custom_call.1} parent=11 // pred_check
          %p339 = pneg %p59
        $region14: #{tpu_custom_call.1} parent=11 // pred_check_branch
          %341 = sbr.rel (%p339) target = $region16
        $region15: #{tpu_custom_call.1} parent=11 // pred_region
          %s342 = smul.u32 2, %s30
          %s344 = ssub.s32 256, 256
          %345 = vsyncadd [#allocation4], %s344
          %s346 = smul.addr %s342, 128
          %s347 = scalar_lea.hbm %s0, %s346
          %s348 = sshll.u32 [#allocation3], 4
          %s349 = int_to_ptr.vmem [resolvable:$true] %s348
          %354 = dma.hbm_to_vmem [thread:$0]  %s347, 256, %s349, [#allocation4], 128, 128, 8
        $region16: #{tpu_custom_call.1} parent=11 // pred_fallthru
          _
        // Predicated region
        $region17: #{tpu_custom_call.1} parent=11 // pred_check
          %p355 = pneg %p85
        $region18: #{tpu_custom_call.1} parent=11 // pred_check_branch
          %357 = sbr.rel (%p355) target = $region20
        $region19: #{tpu_custom_call.1} parent=11 // pred_region
          %s358 = smul.u32 2, %s30
          %s360 = ssub.s32 256, 256
          %361 = vsyncadd [#allocation7], %s360
          %s362 = smul.addr %s358, 128
          %s363 = scalar_lea.hbm %s1, %s362
          %s364 = sshll.u32 [#allocation6], 4
          %s365 = int_to_ptr.vmem [resolvable:$true] %s364
          %370 = dma.hbm_to_vmem [thread:$0]  %s363, 256, %s365, [#allocation7], 128, 128, 8
        $region20: #{tpu_custom_call.1} parent=11 // pred_fallthru
          _
        // Predicated region
        $region21: #{tpu_custom_call.1} parent=11 // pred_check
          %p371 = pneg %p111
        $region22: #{tpu_custom_call.1} parent=11 // pred_check_branch
          %373 = sbr.rel (%p371) target = $region24
        $region23: #{tpu_custom_call.1} parent=11 // pred_region
          %s374 = smul.u32 2, %s30
          %s376 = ssub.s32 256, 256
          %377 = vsyncadd [#allocation7], %s376
          %s378 = smul.addr %s374, 128
          %s379 = scalar_lea.hbm %s2, %s378
          %s380 = sshll.u32 [#allocation8], 4
          %s381 = int_to_ptr.vmem [resolvable:$true] %s380
          %386 = dma.hbm_to_vmem [thread:$0]  %s379, 256, %s381, [#allocation7], 128, 128, 8
        $region24: #{tpu_custom_call.1} parent=11 // pred_fallthru
          _
        // Predicated region
        $region25: #{tpu_custom_call.1} parent=11 // pred_check
          %p387 = pneg %p137
        $region26: #{tpu_custom_call.1} parent=11 // pred_check_branch
          %389 = sbr.rel (%p387) target = $region28
        $region27: #{tpu_custom_call.1} parent=11 // pred_region
          %s390 = smul.u32 2, %s30
          %p391 = scmp.lt.s32.totalorder %s390, 1
          %s392 = scalar_select %p391, %s390, 1
          %s393 = scalar_lea.vmem %s3, %s392
          %s394 = smul.u32 2, %s30
        $region28: #{tpu_custom_call.1} parent=11 // pred_fallthru
          _
        // Predicated region
        $region29: #{tpu_custom_call.1} parent=11 // pred_check
          %p395 = pneg %p214
        $region30: #{tpu_custom_call.1} parent=11 // pred_check_branch
          %397 = sbr.rel (%p395) target = $region32
        $region31: #{tpu_custom_call.1} parent=11 // pred_region
          _
        $region32: #{tpu_custom_call.1} parent=11 // pred_fallthru
          _
        // Predicated region
        $region33: #{tpu_custom_call.1} parent=11 // pred_check
          %p398 = pneg %p235
        $region34: #{tpu_custom_call.1} parent=11 // pred_check_branch
          %400 = sbr.rel (%p398) target = $region36
        $region35: #{tpu_custom_call.1} parent=11 // pred_region
          %s402 = ssub.s32 32, 32
          %403 = vsyncadd [#allocation10], %s402
          %s404 = sshll.u32 [#allocation9], 4
          %s405 = int_to_ptr.vmem [resolvable:$true] %s404
          %410 = dma.hbm_to_vmem [thread:$0]  %s7, 32, %s405, [#allocation10], 16, 16, 1
        $region36: #{tpu_custom_call.1} parent=11 // pred_fallthru
          _
        // Predicated region
        $region37: #{tpu_custom_call.1} parent=11 // pred_check
          %p411 = pneg %p256
        $region38: #{tpu_custom_call.1} parent=11 // pred_check_branch
          %413 = sbr.rel (%p411) target = $region40
        $region39: #{tpu_custom_call.1} parent=11 // pred_region
          _
        $region40: #{tpu_custom_call.1} parent=11 // pred_fallthru
          _
        // Predicated region
        $region41: #{tpu_custom_call.1} parent=11 // pred_check
          %p414 = pneg %p277
        $region42: #{tpu_custom_call.1} parent=11 // pred_check_branch
          %416 = sbr.rel (%p414) target = $region44
        $region43: #{tpu_custom_call.1} parent=11 // pred_region
          _
        $region44: #{tpu_custom_call.1} parent=11 // pred_fallthru
          _
        // Predicated region
        $region45: #{tpu_custom_call.1} parent=11 // pred_check
          %p417 = pneg %p298
        $region46: #{tpu_custom_call.1} parent=11 // pred_check_branch
          %419 = sbr.rel (%p417) target = $region48
        $region47: #{tpu_custom_call.1} parent=11 // pred_region
          _
        $region48: #{tpu_custom_call.1} parent=11 // pred_fallthru
          _
      $region12: #{tpu_custom_call.1} parent=5 // pred_fallthru
        _
      %p420 = scmp.lt.s32.totalorder %s21, 2
      // Predicated region
      $region49: #{tpu_custom_call.1} parent=5 // pred_check
        %p421 = pneg %p420
      $region50: #{tpu_custom_call.1} parent=5 // pred_check_branch
        %423 = sbr.rel (%p421) target = $region52
      $region51: #{tpu_custom_call.1} parent=5 // pred_region
        // Predicated region
        $region53: #{tpu_custom_call.1} parent=51 // pred_check
          %p424 = pneg %p159
        $region54: #{tpu_custom_call.1} parent=51 // pred_check_branch
          %426 = sbr.rel (%p424) target = $region56
        $region55: #{tpu_custom_call.1} parent=51 // pred_region
          %s427 = smul.u32 2, %s28
          %p428 = scmp.lt.s32.totalorder %s29, 1
          %s429 = scalar_select %p428, %s29, 1
          %p430 = scmp.lt.s32.totalorder %s427, 1
          %s431 = scalar_select %p430, %s427, 1
          %s432 = smul.addr %s429, 2
          %s433 = sadd.s32 %s431, %s432
          %s434 = smul.addr %s433, 8
          %s435 = scalar_lea.vmem %s4, %s434
          %s436 = smul.u32 2, %s28
        $region56: #{tpu_custom_call.1} parent=51 // pred_fallthru
          _
        // Predicated region
        $region57: #{tpu_custom_call.1} parent=51 // pred_check
          %p437 = pneg %p187
        $region58: #{tpu_custom_call.1} parent=51 // pred_check_branch
          %439 = sbr.rel (%p437) target = $region60
        $region59: #{tpu_custom_call.1} parent=51 // pred_region
          %s440 = smul.u32 2, %s28
          %p441 = scmp.lt.s32.totalorder %s29, 1
          %s442 = scalar_select %p441, %s29, 1
          %p443 = scmp.lt.s32.totalorder %s440, 1
          %s444 = scalar_select %p443, %s440, 1
          %s445 = smul.addr %s442, 2
          %s446 = sadd.s32 %s444, %s445
          %s447 = smul.addr %s446, 8
          %s448 = scalar_lea.vmem %s5, %s447
          %s449 = smul.u32 2, %s28
        $region60: #{tpu_custom_call.1} parent=51 // pred_fallthru
          _
      $region52: #{tpu_custom_call.1} parent=5 // pred_fallthru
        _
      %p450 = scmp.le.s32.totalorder 1, %s21
      %p451 = scmp.lt.s32.totalorder %s21, 3
      %p452 = pnand %p450, %p451
      %p453 = pneg %p452
      // Predicated region
      $region61: #{tpu_custom_call.1} parent=5 // pred_check
        _
      $region62: #{tpu_custom_call.1} parent=5 // pred_check_branch
        %455 = sbr.rel (%p452) target = $region64
      $region63: #{tpu_custom_call.1} parent=5 // pred_region
        %s456 = ssub.s32 %s21, 1
        // Predicated region
        $region65: #{tpu_custom_call.1} parent=63 // pred_check
          %p457 = pneg %p59
        $region66: #{tpu_custom_call.1} parent=63 // pred_check_branch
          %459 = sbr.rel (%p457) target = $region68
        $region67: #{tpu_custom_call.1} parent=63 // pred_region
          %460 = dma.done [#allocation4], 256
        $region68: #{tpu_custom_call.1} parent=63 // pred_fallthru
          _
        // Predicated region
        $region69: #{tpu_custom_call.1} parent=63 // pred_check
          %p461 = pneg %p85
        $region70: #{tpu_custom_call.1} parent=63 // pred_check_branch
          %463 = sbr.rel (%p461) target = $region72
        $region71: #{tpu_custom_call.1} parent=63 // pred_region
          %464 = dma.done [#allocation7], 256
        $region72: #{tpu_custom_call.1} parent=63 // pred_fallthru
          _
        // Predicated region
        $region73: #{tpu_custom_call.1} parent=63 // pred_check
          %p465 = pneg %p111
        $region74: #{tpu_custom_call.1} parent=63 // pred_check_branch
          %467 = sbr.rel (%p465) target = $region76
        $region75: #{tpu_custom_call.1} parent=63 // pred_region
          %468 = dma.done [#allocation7], 256
        $region76: #{tpu_custom_call.1} parent=63 // pred_fallthru
          _
        // Predicated region
        $region77: #{tpu_custom_call.1} parent=63 // pred_check
          %p469 = pneg %p235
        $region78: #{tpu_custom_call.1} parent=63 // pred_check_branch
          %471 = sbr.rel (%p469) target = $region80
        $region79: #{tpu_custom_call.1} parent=63 // pred_region
          %472 = dma.done [#allocation10], 32
        $region80: #{tpu_custom_call.1} parent=63 // pred_fallthru
          _
        %p473 = pneg %p59
        %p474 = pneg %p56
        %p475 = pneg %p85
        %p476 = pneg %p82
        %p477 = pneg %p111
        %p478 = pneg %p108
        %s479 = smul.u32 2, %s30
        %p480 = scmp.lt.s32.totalorder %s479, 1
        %s481 = scalar_select %p480, %s479, 1
        %s482 = scalar_lea.vmem %s3, %s481
        %p483 = pneg %p137
        %p484 = pneg %p134
        %s485 = smul.u32 2, %s30
        %p486 = scmp.lt.s32.totalorder %s31, 1
        %s487 = scalar_select %p486, %s31, 1
        %p488 = scmp.lt.s32.totalorder %s485, 1
        %s489 = scalar_select %p488, %s485, 1
        %s490 = smul.addr %s487, 2
        %s491 = sadd.s32 %s489, %s490
        %s492 = smul.addr %s491, 8
        %s493 = scalar_lea.vmem %s4, %s492
        %p494 = pneg %p165
        %p495 = pneg %p162
        %s496 = smul.u32 2, %s30
        %p497 = scmp.lt.s32.totalorder %s31, 1
        %s498 = scalar_select %p497, %s31, 1
        %p499 = scmp.lt.s32.totalorder %s496, 1
        %s500 = scalar_select %p499, %s496, 1
        %s501 = smul.addr %s498, 2
        %s502 = sadd.s32 %s500, %s501
        %s503 = smul.addr %s502, 8
        %s504 = scalar_lea.vmem %s5, %s503
        %p505 = pneg %p193
        %p506 = pneg %p190
        %p507 = pneg %p214
        %p508 = pneg %p211
        %p509 = pneg %p235
        %p510 = pneg %p232
        %p511 = pneg %p256
        %p512 = pneg %p253
        %p513 = pneg %p277
        %p514 = pneg %p274
        %p515 = pneg %p298
        %p516 = pneg %p295
        %p517 = pneg %p324
        %p518 = pneg %p321
        %s519 = smul.u32 2, %s30
        %s520 = smul.u32 2, %s30
        %s521 = smul.u32 2, %s30
        %s522 = smul.u32 2, %s30
        %p523 = scmp.lt.s32.totalorder %s522, 1
        %s524 = scalar_select %p523, %s522, 1
        %s525 = scalar_lea.vmem %s3, %s524
        %s526 = smul.u32 2, %s30
        %s527 = smul.u32 2, %s30
        %p528 = scmp.lt.s32.totalorder %s31, 1
        %s529 = scalar_select %p528, %s31, 1
        %p530 = scmp.lt.s32.totalorder %s527, 1
        %s531 = scalar_select %p530, %s527, 1
        %s532 = smul.addr %s529, 2
        %s533 = sadd.s32 %s531, %s532
        %s534 = smul.addr %s533, 8
        %s535 = scalar_lea.vmem %s4, %s534
        %s536 = smul.u32 2, %s30
        %s537 = smul.u32 2, %s30
        %p538 = scmp.lt.s32.totalorder %s31, 1
        %s539 = scalar_select %p538, %s31, 1
        %p540 = scmp.lt.s32.totalorder %s537, 1
        %s541 = scalar_select %p540, %s537, 1
        %s542 = smul.addr %s539, 2
        %s543 = sadd.s32 %s541, %s542
        %s544 = smul.addr %s543, 8
        %s545 = scalar_lea.vmem %s5, %s544
        %s546 = smul.u32 2, %s30
        %s547 = smul.u32 2, %s30
        %p549 = scmp.eq.s32.totalorder %s31, 0
        // Predicated region
        $region81: #{tpu_custom_call.1} parent=63 // pred_check
          %p550 = pneg %p549
        $region82: #{tpu_custom_call.1} parent=63 // pred_check_branch
          %552 = sbr.rel (%p550) target = $region84
        $region83: #{tpu_custom_call.1} parent=63 // pred_region
          %v553 = vld [vmem:[#allocation8] sm:$0xff]
          %v554 = vld [vmem:[#allocation8 + $0x8] sm:$0xff]
          %vm555 = vcmask 261120
          %556 = vst.msk [vmem:[#allocation2] sm:$0xff] %vm555, %v553
          %557 = vst.msk [vmem:[#allocation2 + $0x8] sm:$0xff] %vm555, %v554
        $region84: #{tpu_custom_call.1} parent=63 // pred_fallthru
          _
        %v558 = vld [vmem:[#allocation2] sm:$0xff]
        %v559 = vld [vmem:[#allocation2 + $0x8] sm:$0xff]
        %v560 = vld [vmem:[%s525] sm:$0x1]
        %v561 = vld [vmem:[%s525 + $0x1] sm:$0x1]
        %v562 = vmul.f32 %v558, %v558
        %v563 = vmul.f32 %v559, %v559
        %vm564 = vcmask 261120
        %v565 = vsel %vm564, %v562, 0.0
        %566 = vadd.xlane.f32.xlu0 %v565
        %v567 = vpop.xlane.xlu0 %566
        %v568 = vsel %vm564, %v563, 0.0
        %569 = vadd.xlane.f32.xlu0 %v568
        %v570 = vpop.xlane.xlu0 %569
        %v571 = vmul.f32 %v560, %v560
        %v572 = vmul.f32 %v561, %v561
        %vm573 = vcmask 122880
        %v574 = vsel %vm573, %v571, 0.0
        %575 = vadd.xlane.f32.xlu0 %v574
        %v576 = vpop.xlane.xlu0 %575
        %v577 = vsel %vm573, %v572, 0.0
        %578 = vadd.xlane.f32.xlu0 %v577
        %v579 = vpop.xlane.xlu0 %578
        %v580 = vlaneseq
        %v581 = vshrl.u32 %v580, 7
        %v582 = vsub.s32 0, %v581
        %v583 = vrot.slane %v576, %v582
        %v584 = vlaneseq
        %v585 = vshrl.u32 %v584, 7
        %v586 = vsub.s32 0, %v585
        %v587 = vrot.slane %v579, %v586
        %v588 = vadd.f32 %v567, %v583
        %v589 = vadd.f32 %v570, %v587
        %v590 = vmax.f32 %v588, 1e-24
        %v591 = vmax.f32 %v589, 1e-24
        %v592 = vrsqrt.pop %v590
        %v593 = vrsqrt.pop %v591
        %v594 = vmul.f32 %v558, %v592
        %v595 = vmul.f32 %v559, %v593
        %v598 = vlaneseq
        %v599 = vshrl.u32 %v598, 7
        %v600 = vsub.s32 0, %v599
        %v601 = vrot.slane %v560, %v600
        %v602 = vlaneseq
        %v603 = vshrl.u32 %v602, 7
        %v604 = vsub.s32 0, %v603
        %v605 = vrot.slane %v561, %v604
        %v608 = vmul.f32 %v601, %v592
        %v609 = vmul.f32 %v605, %v593
        %612 = vrot.lane.b32.xlu0 %v608, 32
        %v613 = vpop.permute.xlu0 %612
        %614 = vrot.lane.b32.xlu0 %v609, 32
        %v615 = vpop.permute.xlu0 %614
        %v618 = vsel %vm564, %v594, %v613
        %v619 = vsel %vm564, %v595, %v615
        %v620 = vld [vmem:[#allocation3] sm:$0xff]
        %v621 = vld [vmem:[#allocation3 + $0x8] sm:$0xff]
        %v622 = vld [vmem:[#allocation6] sm:$0xff]
        %v623 = vld [vmem:[#allocation6 + $0x8] sm:$0xff]
        %625 = vset.pattern.permute.xlu0 0
        %626 = vperm.xlu0 %625, %v620
        %v627 = vpop.permute.xlu0 %626
        %630 = vset.pattern.permute.xlu0 0
        %631 = vperm.xlu0 %630, %v621
        %v632 = vpop.permute.xlu0 %631
        %v634 = vlaneseq
        %v635 = vshrl.u32 %v634, 7
        %v636 = vsub.s32 0, %v635
        %v637 = vrot.slane %v618, %v636
        %v638 = vlaneseq
        %v639 = vshrl.u32 %v638, 7
        %v640 = vsub.s32 0, %v639
        %v641 = vrot.slane %v619, %v640
        %v642 = vmul.f32 %v627, %v637
        %v643 = vmul.f32 %v632, %v641
        %v644 = vadd.f32 %v642, 0.0
        %v645 = vadd.f32 %v643, 0.0
        %647 = vset.pattern.permute.xlu0 0
        %648 = vperm.xlu0 %647, %v622
        %v649 = vpop.permute.xlu0 %648
        %652 = vset.pattern.permute.xlu0 0
        %653 = vperm.xlu0 %652, %v623
        %v654 = vpop.permute.xlu0 %653
        %v656 = vmul.f32 %v649, %v637
        %v657 = vmul.f32 %v654, %v641
        %v658 = vadd.f32 %v656, 0.0
        %v659 = vadd.f32 %v657, 0.0
        %660 = vset.pattern.permute.xlu0 1
        %661 = vperm.xlu0 %660, %v620
        %v662 = vpop.permute.xlu0 %661
        %664 = vset.pattern.permute.xlu0 1
        %665 = vperm.xlu0 %664, %v621
        %v666 = vpop.permute.xlu0 %665
        %v668 = vlaneseq
        %v669 = vshrl.u32 %v668, 7
        %v670 = vsub.s32 1, %v669
        %v671 = vrot.slane %v618, %v670
        %v672 = vlaneseq
        %v673 = vshrl.u32 %v672, 7
        %v674 = vsub.s32 1, %v673
        %v675 = vrot.slane %v619, %v674
        %v676 = vmul.f32 %v662, %v671
        %v677 = vmul.f32 %v666, %v675
        %v678 = vadd.f32 %v644, %v676
        %v679 = vadd.f32 %v645, %v677
        %680 = vset.pattern.permute.xlu0 1
        %681 = vperm.xlu0 %680, %v622
        %v682 = vpop.permute.xlu0 %681
        %684 = vset.pattern.permute.xlu0 1
        %685 = vperm.xlu0 %684, %v623
        %v686 = vpop.permute.xlu0 %685
        %v688 = vmul.f32 %v682, %v671
        %v689 = vmul.f32 %v686, %v675
        %v690 = vadd.f32 %v658, %v688
        %v691 = vadd.f32 %v659, %v689
        %692 = vset.pattern.permute.xlu0 2
        %693 = vperm.xlu0 %692, %v620
        %v694 = vpop.permute.xlu0 %693
        %696 = vset.pattern.permute.xlu0 2
        %697 = vperm.xlu0 %696, %v621
        %v698 = vpop.permute.xlu0 %697
        %v700 = vlaneseq
        %v701 = vshrl.u32 %v700, 7
        %v702 = vsub.s32 2, %v701
        %v703 = vrot.slane %v618, %v702
        %v704 = vlaneseq
        %v705 = vshrl.u32 %v704, 7
        %v706 = vsub.s32 2, %v705
        %v707 = vrot.slane %v619, %v706
        %v708 = vmul.f32 %v694, %v703
        %v709 = vmul.f32 %v698, %v707
        %v710 = vadd.f32 %v678, %v708
        %v711 = vadd.f32 %v679, %v709
        %712 = vset.pattern.permute.xlu0 2
        %713 = vperm.xlu0 %712, %v622
        %v714 = vpop.permute.xlu0 %713
        %716 = vset.pattern.permute.xlu0 2
        %717 = vperm.xlu0 %716, %v623
        %v718 = vpop.permute.xlu0 %717
        %v720 = vmul.f32 %v714, %v703
        %v721 = vmul.f32 %v718, %v707
        %v722 = vadd.f32 %v690, %v720
        %v723 = vadd.f32 %v691, %v721
        %724 = vset.pattern.permute.xlu0 3
        %725 = vperm.xlu0 %724, %v620
        %v726 = vpop.permute.xlu0 %725
        %728 = vset.pattern.permute.xlu0 3
        %729 = vperm.xlu0 %728, %v621
        %v730 = vpop.permute.xlu0 %729
        %v732 = vlaneseq
        %v733 = vshrl.u32 %v732, 7
        %v734 = vsub.s32 3, %v733
        %v735 = vrot.slane %v618, %v734
        %v736 = vlaneseq
        %v737 = vshrl.u32 %v736, 7
        %v738 = vsub.s32 3, %v737
        %v739 = vrot.slane %v619, %v738
        %v740 = vmul.f32 %v726, %v735
        %v741 = vmul.f32 %v730, %v739
        %v742 = vadd.f32 %v710, %v740
        %v743 = vadd.f32 %v711, %v741
        %744 = vset.pattern.permute.xlu0 3
        %745 = vperm.xlu0 %744, %v622
        %v746 = vpop.permute.xlu0 %745
        %748 = vset.pattern.permute.xlu0 3
        %749 = vperm.xlu0 %748, %v623
        %v750 = vpop.permute.xlu0 %749
        %v752 = vmul.f32 %v746, %v735
        %v753 = vmul.f32 %v750, %v739
        %v754 = vadd.f32 %v722, %v752
        %v755 = vadd.f32 %v723, %v753
        %756 = vset.pattern.permute.xlu0 4
        %757 = vperm.xlu0 %756, %v620
        %v758 = vpop.permute.xlu0 %757
        %760 = vset.pattern.permute.xlu0 4
        %761 = vperm.xlu0 %760, %v621
        %v762 = vpop.permute.xlu0 %761
        %v764 = vlaneseq
        %v765 = vshrl.u32 %v764, 7
        %v766 = vsub.s32 4, %v765
        %v767 = vrot.slane %v618, %v766
        %v768 = vlaneseq
        %v769 = vshrl.u32 %v768, 7
        %v770 = vsub.s32 4, %v769
        %v771 = vrot.slane %v619, %v770
        %v772 = vmul.f32 %v758, %v767
        %v773 = vmul.f32 %v762, %v771
        %v774 = vadd.f32 %v742, %v772
        %v775 = vadd.f32 %v743, %v773
        %776 = vset.pattern.permute.xlu0 4
        %777 = vperm.xlu0 %776, %v622
        %v778 = vpop.permute.xlu0 %777
        %780 = vset.pattern.permute.xlu0 4
        %781 = vperm.xlu0 %780, %v623
        %v782 = vpop.permute.xlu0 %781
        %v784 = vmul.f32 %v778, %v767
        %v785 = vmul.f32 %v782, %v771
        %v786 = vadd.f32 %v754, %v784
        %v787 = vadd.f32 %v755, %v785
        %788 = vset.pattern.permute.xlu0 5
        %789 = vperm.xlu0 %788, %v620
        %v790 = vpop.permute.xlu0 %789
        %792 = vset.pattern.permute.xlu0 5
        %793 = vperm.xlu0 %792, %v621
        %v794 = vpop.permute.xlu0 %793
        %v796 = vlaneseq
        %v797 = vshrl.u32 %v796, 7
        %v798 = vsub.s32 5, %v797
        %v799 = vrot.slane %v618, %v798
        %v800 = vlaneseq
        %v801 = vshrl.u32 %v800, 7
        %v802 = vsub.s32 5, %v801
        %v803 = vrot.slane %v619, %v802
        %v804 = vmul.f32 %v790, %v799
        %v805 = vmul.f32 %v794, %v803
        %v806 = vadd.f32 %v774, %v804
        %v807 = vadd.f32 %v775, %v805
        %808 = vset.pattern.permute.xlu0 5
        %809 = vperm.xlu0 %808, %v622
        %v810 = vpop.permute.xlu0 %809
        %812 = vset.pattern.permute.xlu0 5
        %813 = vperm.xlu0 %812, %v623
        %v814 = vpop.permute.xlu0 %813
        %v816 = vmul.f32 %v810, %v799
        %v817 = vmul.f32 %v814, %v803
        %v818 = vadd.f32 %v786, %v816
        %v819 = vadd.f32 %v787, %v817
        %820 = vset.pattern.permute.xlu0 6
        %821 = vperm.xlu0 %820, %v620
        %v822 = vpop.permute.xlu0 %821
        %824 = vset.pattern.permute.xlu0 6
        %825 = vperm.xlu0 %824, %v621
        %v826 = vpop.permute.xlu0 %825
        %v828 = vlaneseq
        %v829 = vshrl.u32 %v828, 7
        %v830 = vsub.s32 6, %v829
        %v831 = vrot.slane %v618, %v830
        %v832 = vlaneseq
        %v833 = vshrl.u32 %v832, 7
        %v834 = vsub.s32 6, %v833
        %v835 = vrot.slane %v619, %v834
        %v836 = vmul.f32 %v822, %v831
        %v837 = vmul.f32 %v826, %v835
        %v838 = vadd.f32 %v806, %v836
        %v839 = vadd.f32 %v807, %v837
        %840 = vset.pattern.permute.xlu0 6
        %841 = vperm.xlu0 %840, %v622
        %v842 = vpop.permute.xlu0 %841
        %844 = vset.pattern.permute.xlu0 6
        %845 = vperm.xlu0 %844, %v623
        %v846 = vpop.permute.xlu0 %845
        %v848 = vmul.f32 %v842, %v831
        %v849 = vmul.f32 %v846, %v835
        %v850 = vadd.f32 %v818, %v848
        %v851 = vadd.f32 %v819, %v849
        %852 = vset.pattern.permute.xlu0 7
        %853 = vperm.xlu0 %852, %v620
        %v854 = vpop.permute.xlu0 %853
        %856 = vset.pattern.permute.xlu0 7
        %857 = vperm.xlu0 %856, %v621
        %v858 = vpop.permute.xlu0 %857
        %v860 = vlaneseq
        %v861 = vshrl.u32 %v860, 7
        %v862 = vsub.s32 7, %v861
        %v863 = vrot.slane %v618, %v862
        %v864 = vlaneseq
        %v865 = vshrl.u32 %v864, 7
        %v866 = vsub.s32 7, %v865
        %v867 = vrot.slane %v619, %v866
        %v868 = vmul.f32 %v854, %v863
        %v869 = vmul.f32 %v858, %v867
        %v870 = vadd.f32 %v838, %v868
        %v871 = vadd.f32 %v839, %v869
        %872 = vset.pattern.permute.xlu0 7
        %873 = vperm.xlu0 %872, %v622
        %v874 = vpop.permute.xlu0 %873
        %876 = vset.pattern.permute.xlu0 7
        %877 = vperm.xlu0 %876, %v623
        %v878 = vpop.permute.xlu0 %877
        %v880 = vmul.f32 %v874, %v863
        %v881 = vmul.f32 %v878, %v867
        %v882 = vadd.f32 %v850, %v880
        %v883 = vadd.f32 %v851, %v881
        %v884 = vld [vmem:[%s535] sm:$0xff]
        %v885 = vld [vmem:[%s535 + $0x8] sm:$0xff]
        %v886 = vadd.f32 %v870, %v884
        %v887 = vadd.f32 %v871, %v885
        %v888 = vld [vmem:[%s545] sm:$0xff]
        %v889 = vld [vmem:[%s545 + $0x8] sm:$0xff]
        %v890 = vadd.f32 %v882, %v888
        %v891 = vadd.f32 %v883, %v889
        %v892 = vpack.c.bf16 %v887, %v886
        %v893 = vpack.c.bf16 %v891, %v890
        %v894 = vld [vmem:[%s6] sm:$0xf]
        %v895 = vld [vmem:[%s6 + $0x4] sm:$0xf]
        %v896 = vld [vmem:[%s6 + $0x8] sm:$0xf]
        %v897 = vld [vmem:[%s6 + $0xc] sm:$0xf]
        %v898 = vld [vmem:[%s6 + $0x10] sm:$0xf]
        %v899 = vld [vmem:[%s6 + $0x14] sm:$0xf]
        %v900 = vld [vmem:[#allocation9] sm:$0x1]
        %v902 = vlaneseq
        %v903 = vshrl.u32 %v902, 7
        %v904 = vsub.s32 0, %v903
        %v905 = vrot.slane %v900, %v904
        %v913 = vunpack.c.l.b16 %v894
        %v914 = vunpack.c.l.b16 %v895
        %v915 = vunpack.c.l.b16 %v896
        %v916 = vunpack.c.l.b16 %v897
        %v917 = vunpack.c.l.b16 %v898
        %v918 = vunpack.c.l.b16 %v899
        %v919 = vpack.c.b16 %v914, %v913
        %v920 = vpack.c.b16 %v916, %v915
        %v921 = vpack.c.b16 %v918, %v917
        %vm925 = vcmask 392192
        %v927 = vsel %vm925, %v892, 0
        %929 = vmatprep.subr.bf16.mxu0 0
        %930 = vmatpush1.bf16.msra.mxu0 %v919
        %931 = vmatprep.subr.bf16.mxu0 0
        %932 = vmatpush1.bf16.msra.mxu0 %v920
        %933 = vmatprep.subr.bf16.mxu0 0
        %934 = vmatpush1.bf16.msra.mxu0 %v921
        %935 = vmatprep.subr.bf16.mxu0 0
        %936 = vmatpush1.bf16.msra.mxu0 0
        %937 = vmatprep.subr.bf16.mxu0 0
        %938 = vmatpush1.bf16.msra.mxu0 0
        %939 = vmatprep.subr.bf16.mxu0 0
        %940 = vmatpush1.bf16.msra.mxu0 0
        %941 = vmatprep.subr.bf16.mxu0 0
        %942 = vmatpush1.bf16.msra.mxu0 0
        %943 = vmatprep.subr.bf16.mxu0 0
        %944 = vmatpush1.bf16.msra.mxu0 0
        %945 = vmatprep.subr.bf16.mxu0 0
        %946 = vmatpush1.bf16.msra.mxu0 0
        %947 = vmatprep.subr.bf16.mxu0 0
        %948 = vmatpush1.bf16.msra.mxu0 0
        %949 = vmatprep.subr.bf16.mxu0 0
        %950 = vmatpush1.bf16.msra.mxu0 0
        %951 = vmatprep.subr.bf16.mxu0 0
        %952 = vmatpush1.bf16.msra.mxu0 0
        %953 = vmatprep.subr.bf16.mxu0 0
        %954 = vmatpush1.bf16.msra.mxu0 0
        %955 = vmatprep.subr.bf16.mxu0 0
        %956 = vmatpush1.bf16.msra.mxu0 0
        %957 = vmatprep.subr.bf16.mxu0 0
        %958 = vmatpush1.bf16.msra.mxu0 0
        %959 = vmatprep.subr.bf16.mxu0 0
        %960 = vmatpush1.bf16.msra.mxu0 0
        %961 = vmatprep.mubr.bf16.mxu0 0
        %962 = vmatmul.mubr.bf16.gmra.mrb[0].mxu0 %v927
        %v963 = vpop.f32.mrb[0].mxu0
        %v964 = vadd.f32 %v905, %v963
        %v965 = vpop.f32.mrb[0].mxu0
        %v966 = vpop.f32.mrb[0].mxu0
        %v967 = vadd.f32 %v905, %v966
        %v968 = vpop.f32.mrb[0].mxu0
        %969 = vdwg.mxu0
        %s970 = scalar_lea.vmem %s6, 24
        %v971 = vld [vmem:[%s970] sm:$0xf]
        %v972 = vld [vmem:[%s970 + $0x4] sm:$0xf]
        %v973 = vld [vmem:[%s970 + $0x8] sm:$0xf]
        %v974 = vld [vmem:[%s970 + $0xc] sm:$0xf]
        %v975 = vld [vmem:[%s970 + $0x10] sm:$0xf]
        %v976 = vld [vmem:[%s970 + $0x14] sm:$0xf]
        %s977 = scalar_lea.vmem [#allocation9], 1
        %v978 = vld [vmem:[%s977] sm:$0x1]
        %v980 = vlaneseq
        %v981 = vshrl.u32 %v980, 7
        %v982 = vsub.s32 0, %v981
        %v983 = vrot.slane %v978, %v982
        %v991 = vunpack.c.l.b16 %v971
        %v992 = vunpack.c.l.b16 %v972
        %v993 = vunpack.c.l.b16 %v973
        %v994 = vunpack.c.l.b16 %v974
        %v995 = vunpack.c.l.b16 %v975
        %v996 = vunpack.c.l.b16 %v976
        %v997 = vpack.c.b16 %v992, %v991
        %v998 = vpack.c.b16 %v994, %v993
        %v999 = vpack.c.b16 %v996, %v995
        %v1004 = vsel %vm925, %v893, 0
        %1006 = vmatprep.subr.bf16.mxu0 0
        %1007 = vmatpush1.bf16.msra.mxu0 %v997
        %1008 = vmatprep.subr.bf16.mxu0 0
        %1009 = vmatpush1.bf16.msra.mxu0 %v998
        %1010 = vmatprep.subr.bf16.mxu0 0
        %1011 = vmatpush1.bf16.msra.mxu0 %v999
        %1012 = vmatprep.subr.bf16.mxu0 0
        %1013 = vmatpush1.bf16.msra.mxu0 0
        %1014 = vmatprep.subr.bf16.mxu0 0
        %1015 = vmatpush1.bf16.msra.mxu0 0
        %1016 = vmatprep.subr.bf16.mxu0 0
        %1017 = vmatpush1.bf16.msra.mxu0 0
        %1018 = vmatprep.subr.bf16.mxu0 0
        %1019 = vmatpush1.bf16.msra.mxu0 0
        %1020 = vmatprep.subr.bf16.mxu0 0
        %1021 = vmatpush1.bf16.msra.mxu0 0
        %1022 = vmatprep.subr.bf16.mxu0 0
        %1023 = vmatpush1.bf16.msra.mxu0 0
        %1024 = vmatprep.subr.bf16.mxu0 0
        %1025 = vmatpush1.bf16.msra.mxu0 0
        %1026 = vmatprep.subr.bf16.mxu0 0
        %1027 = vmatpush1.bf16.msra.mxu0 0
        %1028 = vmatprep.subr.bf16.mxu0 0
        %1029 = vmatpush1.bf16.msra.mxu0 0
        %1030 = vmatprep.subr.bf16.mxu0 0
        %1031 = vmatpush1.bf16.msra.mxu0 0
        %1032 = vmatprep.subr.bf16.mxu0 0
        %1033 = vmatpush1.bf16.msra.mxu0 0
        %1034 = vmatprep.subr.bf16.mxu0 0
        %1035 = vmatpush1.bf16.msra.mxu0 0
        %1036 = vmatprep.subr.bf16.mxu0 0
        %1037 = vmatpush1.bf16.msra.mxu0 0
        %1038 = vmatprep.mubr.bf16.mxu0 0
        %1039 = vmatmul.mubr.bf16.gmra.mrb[0].mxu0 %v1004
        %v1040 = vpop.f32.mrb[0].mxu0
        %v1041 = vadd.f32 %v983, %v1040
        %v1042 = vpop.f32.mrb[0].mxu0
        %v1043 = vpop.f32.mrb[0].mxu0
        %v1044 = vadd.f32 %v983, %v1043
        %v1045 = vpop.f32.mrb[0].mxu0
        %1046 = vdwg.mxu0
        %1049 = vrot.lane.b32.xlu0 %v1041, 32
        %v1050 = vpop.permute.xlu0 %1049
        %1051 = vrot.lane.b32.xlu0 %v1044, 32
        %v1052 = vpop.permute.xlu0 %1051
        %v1055 = vsel %vm564, %v964, %v1050
        %v1056 = vsel %vm564, %v967, %v1052
        %v1057 = vpack.c.bf16 %v1056, %v1055
        %v1058 = vld [vmem:[%s8] sm:$0xf]
        %v1059 = vld [vmem:[%s8 + $0x4] sm:$0xf]
        %v1060 = vld [vmem:[%s8 + $0x8] sm:$0xf]
        %v1061 = vld [vmem:[%s8 + $0xc] sm:$0xf]
        %v1062 = vld [vmem:[%s8 + $0x10] sm:$0xf]
        %v1063 = vld [vmem:[%s8 + $0x14] sm:$0xf]
        %v1064 = vld [vmem:[%s8 + $0x18] sm:$0xf]
        %v1065 = vld [vmem:[%s8 + $0x1c] sm:$0xf]
        %v1066 = vld [vmem:[%s10] sm:$0x1]
        %v1068 = vlaneseq
        %v1069 = vshrl.u32 %v1068, 7
        %v1070 = vsub.s32 0, %v1069
        %v1071 = vrot.slane %v1066, %v1070
        %v1081 = vunpack.c.l.b16 %v1058
        %v1082 = vunpack.c.l.b16 %v1059
        %v1083 = vunpack.c.l.b16 %v1060
        %v1084 = vunpack.c.l.b16 %v1061
        %v1085 = vunpack.c.l.b16 %v1062
        %v1086 = vunpack.c.l.b16 %v1063
        %v1087 = vunpack.c.l.b16 %v1064
        %v1088 = vunpack.c.l.b16 %v1065
        %v1089 = vpack.c.b16 %v1082, %v1081
        %v1090 = vpack.c.b16 %v1084, %v1083
        %v1091 = vpack.c.b16 %v1086, %v1085
        %v1092 = vpack.c.b16 %v1088, %v1087
        %vm1097 = vcmask 523264
        %v1099 = vsel %vm1097, %v1057, 0
        %1101 = vmatprep.subr.bf16.mxu0 0
        %1102 = vmatpush1.bf16.msra.mxu0 %v1089
        %1103 = vmatprep.subr.bf16.mxu0 0
        %1104 = vmatpush1.bf16.msra.mxu0 %v1090
        %1105 = vmatprep.subr.bf16.mxu0 0
        %1106 = vmatpush1.bf16.msra.mxu0 %v1091
        %1107 = vmatprep.subr.bf16.mxu0 0
        %1108 = vmatpush1.bf16.msra.mxu0 %v1092
        %1109 = vmatprep.subr.bf16.mxu0 0
        %1110 = vmatpush1.bf16.msra.mxu0 0
        %1111 = vmatprep.subr.bf16.mxu0 0
        %1112 = vmatpush1.bf16.msra.mxu0 0
        %1113 = vmatprep.subr.bf16.mxu0 0
        %1114 = vmatpush1.bf16.msra.mxu0 0
        %1115 = vmatprep.subr.bf16.mxu0 0
        %1116 = vmatpush1.bf16.msra.mxu0 0
        %1117 = vmatprep.subr.bf16.mxu0 0
        %1118 = vmatpush1.bf16.msra.mxu0 0
        %1119 = vmatprep.subr.bf16.mxu0 0
        %1120 = vmatpush1.bf16.msra.mxu0 0
        %1121 = vmatprep.subr.bf16.mxu0 0
        %1122 = vmatpush1.bf16.msra.mxu0 0
        %1123 = vmatprep.subr.bf16.mxu0 0
        %1124 = vmatpush1.bf16.msra.mxu0 0
        %1125 = vmatprep.subr.bf16.mxu0 0
        %1126 = vmatpush1.bf16.msra.mxu0 0
        %1127 = vmatprep.subr.bf16.mxu0 0
        %1128 = vmatpush1.bf16.msra.mxu0 0
        %1129 = vmatprep.subr.bf16.mxu0 0
        %1130 = vmatpush1.bf16.msra.mxu0 0
        %1131 = vmatprep.subr.bf16.mxu0 0
        %1132 = vmatpush1.bf16.msra.mxu0 0
        %1133 = vmatprep.mubr.bf16.mxu0 0
        %1134 = vmatmul.mubr.bf16.gmra.mrb[0].mxu0 %v1099
        %v1135 = vpop.f32.mrb[0].mxu0
        %v1136 = vadd.f32 %v1071, %v1135
        %v1137 = vpop.f32.mrb[0].mxu0
        %v1138 = vpop.f32.mrb[0].mxu0
        %v1139 = vadd.f32 %v1071, %v1138
        %v1140 = vpop.f32.mrb[0].mxu0
        %1141 = vdwg.mxu0
        %v1142 = vpack.c.bf16 %v595, %v594
        %v1143 = vld [vmem:[%s9] sm:$0xf]
        %v1144 = vld [vmem:[%s9 + $0x4] sm:$0xf]
        %v1145 = vld [vmem:[%s9 + $0x8] sm:$0xf]
        %v1146 = vld [vmem:[%s9 + $0xc] sm:$0xf]
        %s1147 = scalar_lea.vmem %s10, 1
        %v1148 = vld [vmem:[%s1147] sm:$0x1]
        %v1150 = vlaneseq
        %v1151 = vshrl.u32 %v1150, 7
        %v1152 = vsub.s32 0, %v1151
        %v1153 = vrot.slane %v1148, %v1152
        %v1159 = vunpack.c.l.b16 %v1143
        %v1160 = vunpack.c.l.b16 %v1144
        %v1161 = vunpack.c.l.b16 %v1145
        %v1162 = vunpack.c.l.b16 %v1146
        %v1163 = vpack.c.b16 %v1160, %v1159
        %v1164 = vpack.c.b16 %v1162, %v1161
        %v1168 = vsel %vm564, %v1142, 0
        %1170 = vmatprep.subr.bf16.mxu0 0
        %1171 = vmatpush1.bf16.msra.mxu0 %v1163
        %1172 = vmatprep.subr.bf16.mxu0 0
        %1173 = vmatpush1.bf16.msra.mxu0 %v1164
        %1174 = vmatprep.subr.bf16.mxu0 0
        %1175 = vmatpush1.bf16.msra.mxu0 0
        %1176 = vmatprep.subr.bf16.mxu0 0
        %1177 = vmatpush1.bf16.msra.mxu0 0
        %1178 = vmatprep.subr.bf16.mxu0 0
        %1179 = vmatpush1.bf16.msra.mxu0 0
        %1180 = vmatprep.subr.bf16.mxu0 0
        %1181 = vmatpush1.bf16.msra.mxu0 0
        %1182 = vmatprep.subr.bf16.mxu0 0
        %1183 = vmatpush1.bf16.msra.mxu0 0
        %1184 = vmatprep.subr.bf16.mxu0 0
        %1185 = vmatpush1.bf16.msra.mxu0 0
        %1186 = vmatprep.subr.bf16.mxu0 0
        %1187 = vmatpush1.bf16.msra.mxu0 0
        %1188 = vmatprep.subr.bf16.mxu0 0
        %1189 = vmatpush1.bf16.msra.mxu0 0
        %1190 = vmatprep.subr.bf16.mxu0 0
        %1191 = vmatpush1.bf16.msra.mxu0 0
        %1192 = vmatprep.subr.bf16.mxu0 0
        %1193 = vmatpush1.bf16.msra.mxu0 0
        %1194 = vmatprep.subr.bf16.mxu0 0
        %1195 = vmatpush1.bf16.msra.mxu0 0
        %1196 = vmatprep.subr.bf16.mxu0 0
        %1197 = vmatpush1.bf16.msra.mxu0 0
        %1198 = vmatprep.subr.bf16.mxu0 0
        %1199 = vmatpush1.bf16.msra.mxu0 0
        %1200 = vmatprep.subr.bf16.mxu0 0
        %1201 = vmatpush1.bf16.msra.mxu0 0
        %1202 = vmatprep.mubr.bf16.mxu0 0
        %1203 = vmatmul.mubr.bf16.gmra.mrb[0].mxu0 %v1168
        %v1204 = vpop.f32.mrb[0].mxu0
        %v1205 = vadd.f32 %v1153, %v1204
        %v1206 = vpop.f32.mrb[0].mxu0
        %v1207 = vpop.f32.mrb[0].mxu0
        %v1208 = vadd.f32 %v1153, %v1207
        %v1209 = vpop.f32.mrb[0].mxu0
        %1210 = vdwg.mxu0
        %v1211 = vadd.f32 %v1136, %v1205
        %v1212 = vadd.f32 %v1139, %v1208
        %v1213 = vxor.u32 %v1211, 2147483648
        %v1214 = vxor.u32 %v1212, 2147483648
        %v1215 = vmul.f32 %v1213, 1.442695
        %v1216 = vpow.pop %v1215
        %v1217 = vmul.f32 %v1214, 1.442695
        %v1218 = vpow.pop %v1217
        %v1219 = vadd.f32 %v1216, 1.0
        %v1220 = vadd.f32 %v1218, 1.0
        %v1221 = vrcp.pop %v1219
        %v1222 = vmul.f32 1.0, %v1221
        %v1223 = vrcp.pop %v1220
        %v1224 = vmul.f32 1.0, %v1223
        %1227 = vrot.lane.b32.xlu0 %v1205, 64
        %v1228 = vpop.permute.xlu0 %1227
        %1229 = vrot.lane.b32.xlu0 %v1208, 64
        %v1230 = vpop.permute.xlu0 %1229
        %v1233 = vmul.f32 %v1222, %v1228
        %v1234 = vmul.f32 %v1224, %v1230
        %1237 = vrot.lane.b32.xlu0 %v1233, 64
        %v1238 = vpop.permute.xlu0 %1237
        %1239 = vrot.lane.b32.xlu0 %v1234, 64
        %v1240 = vpop.permute.xlu0 %1239
        %v1243 = vadd.f32 %v1136, %v1238
        %v1244 = vadd.f32 %v1139, %v1240
        %v1245 = vtanh.pop %v1243
        %v1246 = vtanh.pop %v1244
        %1249 = vrot.lane.b32.xlu0 %v594, 64
        %v1250 = vpop.permute.xlu0 %1249
        %1251 = vrot.lane.b32.xlu0 %v595, 64
        %v1252 = vpop.permute.xlu0 %1251
        %v1255 = vsub.f32 %v1245, %v1250
        %v1256 = vsub.f32 %v1246, %v1252
        %1259 = vrot.lane.b32.xlu0 %v1255, 96
        %v1260 = vpop.permute.xlu0 %1259
        %1261 = vrot.lane.b32.xlu0 %v1256, 96
        %v1262 = vpop.permute.xlu0 %1261
        %v1265 = vmul.f32 %v1222, %v1260
        %v1266 = vmul.f32 %v1224, %v1262
        %1269 = vrot.lane.b32.xlu0 %v1265, 96
        %v1270 = vpop.permute.xlu0 %1269
        %1271 = vrot.lane.b32.xlu0 %v1266, 96
        %v1272 = vpop.permute.xlu0 %1271
        %v1275 = vadd.f32 %v594, %v1270
        %v1276 = vadd.f32 %v595, %v1272
        %1277 = vst.msk [vmem:[#allocation2] sm:$0xff] %vm564, %v1275
        %1278 = vst.msk [vmem:[#allocation2 + $0x8] sm:$0xff] %vm564, %v1276
        %p1279 = scmp.eq.s32.totalorder %s31, 1
        // Predicated region
        $region85: #{tpu_custom_call.1} parent=63 // pred_check
          %p1280 = pneg %p1279
        $region86: #{tpu_custom_call.1} parent=63 // pred_check_branch
          %1282 = sbr.rel (%p1280) target = $region88
        $region87: #{tpu_custom_call.1} parent=63 // pred_region
          %1283 = vst.msk [vmem:[#allocation11] sm:$0xff] %vm564, %v1275
          %1284 = vst.msk [vmem:[#allocation11 + $0x8] sm:$0xff] %vm564, %v1276
        $region88: #{tpu_custom_call.1} parent=63 // pred_fallthru
          _
        // Predicated region
        $region89: #{tpu_custom_call.1} parent=63 // pred_check
          %p1285 = pneg %p321
        $region90: #{tpu_custom_call.1} parent=63 // pred_check_branch
          %1287 = sbr.rel (%p1285) target = $region92
        $region91: #{tpu_custom_call.1} parent=63 // pred_region
          %s1288 = smul.u32 2, %s30
          %s1290 = ssub.s32 256, 256
          %1291 = vsyncadd [#allocation5], %s1290
          %s1292 = smul.addr %s1288, 128
          %s1293 = scalar_lea.hbm %s11, %s1292
          %s1294 = sshll.u32 [#allocation11], 4
          %s1295 = int_to_ptr.vmem [resolvable:$true] %s1294
          %1300 = dma.vmem_to_hbm [thread:$0]  %s1295, 256, %s1293, [#allocation5], 128, 128, 8
        $region92: #{tpu_custom_call.1} parent=63 // pred_fallthru
          _
        // Predicated region
        $region93: #{tpu_custom_call.1} parent=63 // pred_check
          %p1301 = pneg %p321
        $region94: #{tpu_custom_call.1} parent=63 // pred_check_branch
          %1303 = sbr.rel (%p1301) target = $region96
        $region95: #{tpu_custom_call.1} parent=63 // pred_region
          %1304 = dma.done [#allocation5], 256
        $region96: #{tpu_custom_call.1} parent=63 // pred_fallthru
          _
      $region64: #{tpu_custom_call.1} parent=5 // pred_fallthru
        _
      %p1305 = scmp.le.s32.totalorder 2, %s21
      // Predicated region
      $region97: #{tpu_custom_call.1} parent=5 // pred_check
        %p1306 = pneg %p1305
      $region98: #{tpu_custom_call.1} parent=5 // pred_check_branch
        %1308 = sbr.rel (%p1306) target = $region100
      $region99: #{tpu_custom_call.1} parent=5 // pred_region
        %s1309 = ssub.s32 %s21, 2
      $region100: #{tpu_custom_call.1} parent=5 // pred_fallthru
        _
    $region6: #{tpu_custom_call.1} parent=1 // loop_footer
      %s25 = sadd.s32 1, %s21
    $region7: #{tpu_custom_call.1} parent=1 // loop_footer_branch
      %20 = sbr.rel target = $region3
    $region8: #{tpu_custom_call.1} parent=1 // loop_exit
      _
    %1310 = vsyncpa [#allocation4], 1
    %s1311 = scalar_lea.sflag [#allocation4], 1
    %1312 = vsyncpa %s1311, 1
    %1313 = vsyncpa [#allocation7], 1
    %1314 = vsyncpa [#allocation10], 1
    %1315 = vsyncpa [#allocation5], 1
    %s1316 = scalar_lea.sflag [#allocation5], 1
    %1317 = vsyncpa %s1316, 1

</llo_original>
